<compile_context>
chip_gen: v6e
topology: v6e:2x2x1
jax: 0.10.0
libtpu: 0.0.40
codegen_flags: <defaults>
</compile_context>

<pallas_src>
from functools import partial

import jax
import jax.numpy as jnp
from jax import lax
from jax.experimental import pallas as pl
from jax.experimental.pallas import tpu as pltpu


def gru_recurrence_kernel(x_ref, w_ih_ref, b_i_ref, w_hh_ref, b_hn_ref, out_ref):
    """Full Te-step GRU recurrence in a single kernel invocation.

    x_ref    : (Te, A, 2)  f32  raw inputs.
    w_ih_ref : (2, 3*Hp)   f32  input->hidden weights, gates [r|z|n] at
               lane offsets 0 / Hp / 2*Hp, each gate zero-padded H -> Hp.
    b_i_ref  : (1, 3*Hp)   f32  b_ih (all gates) + b_hh (r,z gates) folded.
    w_hh_ref : (Hp, 3*Hp)  bf16 hidden->hidden weights, gate-concatenated,
               K and per-gate N zero-padded H -> Hp.
    b_hn_ref : (1, Hp)     f32  hidden bias of the n gate (stays inside r*(...)).
    out_ref  : (A, Hp)     f32  final hidden state h_{Te-1} (padded lanes = 0).
    """
    te = x_ref.shape[0]
    a = x_ref.shape[1]
    hp = out_ref.shape[1]

    # Loop-invariant loads (small).
    w_ih = w_ih_ref[...]                  # (2, 3Hp) f32
    w0 = w_ih[0:1, :]                     # (1, 3Hp)
    w1 = w_ih[1:2, :]                     # (1, 3Hp)
    b_i = b_i_ref[...]                    # (1, 3Hp)
    w_hh = w_hh_ref[...]                  # (Hp, 3Hp) bf16
    b_hn = b_hn_ref[...]                  # (1, Hp)

    def sigmoid1(v):
        # Single-EUP-op sigmoid: sigma(x) = 0.5*tanh(0.5*x) + 0.5 (exact identity).
        return 0.5 * jnp.tanh(0.5 * v) + 0.5

    def step(t, h):
        x_t = x_ref[t]                                           # (A, 2) f32
        # Input-side gate pre-activations: two VPU broadcast madds (no MXU).
        gi = x_t[:, 0:1] * w0 + x_t[:, 1:2] * w1 + b_i           # (A, 3Hp) f32
        # One fused MXU matmul for all three hidden-side gates, bf16 in / f32 acc.
        gh = jnp.dot(h.astype(jnp.bfloat16), w_hh,
                     preferred_element_type=jnp.float32)          # (A, 3Hp) f32
        # Lane-aligned gate slices (offsets are multiples of 128).
        r = sigmoid1(gi[:, 0:hp] + gh[:, 0:hp])
        z = sigmoid1(gi[:, hp:2 * hp] + gh[:, hp:2 * hp])
        n = jnp.tanh(gi[:, 2 * hp:3 * hp] + r * (gh[:, 2 * hp:3 * hp] + b_hn))
        return (1.0 - z) * n + z * h

    # Padded lanes stay exactly zero through every step (all padded weight
    # rows/cols and bias lanes are zero and h0 starts at zero); the wrapper's
    # [:, :H] slice makes the result robust regardless.
    h0 = jnp.zeros((a, hp), jnp.float32)
    h_last = lax.fori_loop(0, te, step, h0, unroll=True)

    out_ref[...] = h_last                 # single lane-dense store at the end


def pack_motion_encoder_params(w_ih, w_hh, b_ih, b_hh):
    """One-time (model-load-time) packing of GRU params into the kernel layout.

    Inputs (gate order r, z, n): w_ih (3, In, H), w_hh (3, H, H),
                                 b_ih (3, H),     b_hh (3, H).
    Returns (w_ih_cat f32 (In,3Hp), w_hh_cat bf16 (Hp,3Hp),
             b_i_comb f32 (1,3Hp),  b_hn f32 (1,Hp)).
    """
    H = w_hh.shape[-1]
    Hp = ((H + 127) // 128) * 128          # 150 -> 256 (lane-aligned gates)

    def pad_last(v):                       # zero-pad last dim H -> Hp
        return jnp.pad(v, [(0, 0)] * (v.ndim - 1) + [(0, Hp - H)])

    w_ih_cat = jnp.concatenate([pad_last(w_ih[g]) for g in range(3)], axis=-1)
    w_hh_cat = jnp.concatenate(
        [jnp.pad(w_hh[g], ((0, Hp - H), (0, Hp - H))) for g in range(3)],
        axis=-1).astype(jnp.bfloat16)
    # Fold b_ih (all gates) plus b_hh's r/z parts into one additive bias; b_hn
    # must stay inside r * (W_hn h + b_hn) to match nn.GRU.
    b_i_comb = jnp.concatenate(
        [pad_last((b_ih[0] + b_hh[0])[None, :]),
         pad_last((b_ih[1] + b_hh[1])[None, :]),
         pad_last(b_ih[2][None, :])], axis=-1)
    b_hn = pad_last(b_hh[2][None, :])
    return w_ih_cat, w_hh_cat, b_i_comb, b_hn


@partial(jax.jit, static_argnames=("hidden_size",))
def motion_encoder_pallas(x, w_ih_cat, w_hh_cat, b_i_comb, b_hn, *, hidden_size):
    """x: (Te, A, 2) f32; packed params from pack_motion_encoder_params.
       Returns (A, hidden_size) f32 == PyTorch `gru(x)[0][-1]`.
    """
    Te, A, In = x.shape
    Hp = w_hh_cat.shape[0]

    out_padded = pl.pallas_call(
        gru_recurrence_kernel,
        out_shape=jax.ShapeDtypeStruct((A, Hp), jnp.float32),
        # No grid: everything (<0.5 MiB total) lives in VMEM for the whole call.
        in_specs=[
            pl.BlockSpec(memory_space=pltpu.MemorySpace.VMEM),   # x
            pl.BlockSpec(memory_space=pltpu.MemorySpace.VMEM),   # w_ih_cat
            pl.BlockSpec(memory_space=pltpu.MemorySpace.VMEM),   # b_i_comb
            pl.BlockSpec(memory_space=pltpu.MemorySpace.VMEM),   # w_hh_cat (bf16)
            pl.BlockSpec(memory_space=pltpu.MemorySpace.VMEM),   # b_hn
        ],
        out_specs=pl.BlockSpec(memory_space=pltpu.MemorySpace.VMEM),
    )(x, w_ih_cat, b_i_comb, w_hh_cat, b_hn)

    return out_padded[:, :hidden_size]


def motion_encoder_ref(x, w_ih, w_hh, b_ih, b_hh):
    """Pure-JAX f32 reference (lax.scan) matching PyTorch nn.GRU semantics."""
    H = w_hh.shape[-1]

    def step(h, x_t):
        gi = [x_t @ w_ih[g] + b_ih[g] for g in range(3)]
        gh = [h @ w_hh[g] + b_hh[g] for g in range(3)]
        r = jax.nn.sigmoid(gi[0] + gh[0])
        z = jax.nn.sigmoid(gi[1] + gh[1])
        n = jnp.tanh(gi[2] + r * gh[2])
        h_new = (1.0 - z) * n + z * h
        return h_new, None

    h0 = jnp.zeros((x.shape[1], H), jnp.float32)
    h_last, _ = lax.scan(step, h0, x)
    return h_last


if __name__ == "__main__":
    Te, A, In, H = 8, 8, 2, 150  # hidden_size=150 as in the module default

    key = jax.random.PRNGKey(0)
    kx, k1, k2, k3, k4 = jax.random.split(key, 5)

    bound = 1.0 / (H ** 0.5)
    x = jax.random.normal(kx, (Te, A, In), dtype=jnp.float32)
    w_ih = jax.random.uniform(k1, (3, In, H), jnp.float32, -bound, bound)
    w_hh = jax.random.uniform(k2, (3, H, H), jnp.float32, -bound, bound)
    b_ih = jax.random.uniform(k3, (3, H), jnp.float32, -bound, bound)
    b_hh = jax.random.uniform(k4, (3, H), jnp.float32, -bound, bound)

    # One-time packing (would be done at model load in a real pipeline).
    packed = pack_motion_encoder_params(w_ih, w_hh, b_ih, b_hh)
    packed = jax.tree_util.tree_map(jax.block_until_ready, packed)

    out = motion_encoder_pallas(x, *packed, hidden_size=H)
    out = jax.block_until_ready(out)

    ref = motion_encoder_ref(x, w_ih, w_hh, b_ih, b_hh)
    assert out.shape == (A, H), out.shape
    max_err = float(jnp.max(jnp.abs(out - ref)))
    # Tolerance relaxed because W_hh is held in bfloat16 (f32 accumulation).
    assert jnp.allclose(out, ref, atol=2e-2, rtol=2e-2), f"max abs err = {max_err}"

    print("KERNEL_OK")
</pallas_src>

<mosaic_0001>
module attributes {stable_mosaic.version = 11 : i64} {
  func.func @gru_recurrence_kernel(%arg0: memref<8x8x2xf32, #tpu.memory_space<vmem>>, %arg1: memref<2x768xf32, #tpu.memory_space<vmem>>, %arg2: memref<1x768xf32, #tpu.memory_space<vmem>>, %arg3: memref<256x768xbf16, #tpu.memory_space<vmem>>, %arg4: memref<1x256xf32, #tpu.memory_space<vmem>>, %arg5: memref<8x256xf32, #tpu.memory_space<vmem>>) attributes {dimension_semantics = [], scalar_prefetch = 0 : i64, scratch_operands = 0 : i64, tpu.core_type = #tpu.core_type<tc>} {
    %c0 = arith.constant 0 : index
    %c0_0 = arith.constant 0 : index
    %0 = vector.load %arg1[%c0, %c0_0] : memref<2x768xf32, #tpu.memory_space<vmem>>, vector<2x768xf32>
    %1 = vector.extract_strided_slice %0 {offsets = [0, 0], sizes = [1, 768], strides = [1, 1]} : vector<2x768xf32> to vector<1x768xf32>
    %2 = vector.extract_strided_slice %0 {offsets = [1, 0], sizes = [1, 768], strides = [1, 1]} : vector<2x768xf32> to vector<1x768xf32>
    %c0_1 = arith.constant 0 : index
    %c0_2 = arith.constant 0 : index
    %3 = vector.load %arg2[%c0_1, %c0_2] : memref<1x768xf32, #tpu.memory_space<vmem>>, vector<1x768xf32>
    %c0_3 = arith.constant 0 : index
    %c0_4 = arith.constant 0 : index
    %4 = vector.load %arg3[%c0_3, %c0_4] : memref<256x768xbf16, #tpu.memory_space<vmem>>, vector<256x768xbf16>
    %c0_5 = arith.constant 0 : index
    %c0_6 = arith.constant 0 : index
    %5 = vector.load %arg4[%c0_5, %c0_6] : memref<1x256xf32, #tpu.memory_space<vmem>>, vector<1x256xf32>
    %cst = arith.constant 0.000000e+00 : f32
    %6 = vector.broadcast %cst : f32 to vector<8x256xf32>
    %c0_i32 = arith.constant 0 : i32
    %7 = arith.index_cast %c0_i32 : i32 to index
    %c0_7 = arith.constant 0 : index
    %c0_8 = arith.constant 0 : index
    %8 = vector.load %arg0[%7, %c0_7, %c0_8] : memref<8x8x2xf32, #tpu.memory_space<vmem>>, vector<1x8x2xf32>
    %9 = vector.shape_cast %8 : vector<1x8x2xf32> to vector<8x2xf32>
    %10 = vector.extract_strided_slice %9 {offsets = [0, 0], sizes = [8, 1], strides = [1, 1]} : vector<8x2xf32> to vector<8x1xf32>
    %11 = vector.broadcast %10 : vector<8x1xf32> to vector<8x768xf32>
    %12 = vector.broadcast %1 : vector<1x768xf32> to vector<8x768xf32>
    %13 = arith.mulf %11, %12 : vector<8x768xf32>
    %14 = vector.extract_strided_slice %9 {offsets = [0, 1], sizes = [8, 1], strides = [1, 1]} : vector<8x2xf32> to vector<8x1xf32>
    %15 = vector.broadcast %14 : vector<8x1xf32> to vector<8x768xf32>
    %16 = vector.broadcast %2 : vector<1x768xf32> to vector<8x768xf32>
    %17 = arith.mulf %15, %16 : vector<8x768xf32>
    %18 = arith.addf %13, %17 : vector<8x768xf32>
    %19 = vector.broadcast %3 : vector<1x768xf32> to vector<8x768xf32>
    %20 = arith.addf %18, %19 : vector<8x768xf32>
    %21 = arith.truncf %6 : vector<8x256xf32> to vector<8x256xbf16>
    %cst_9 = arith.constant dense<0.000000e+00> : vector<8x768xf32>
    %22 = tpu.matmul %21, %4, %cst_9 {dimension_numbers = #tpu.dot_dimension_numbers<[1], [0], [0], [1], [0, 0, 1, 1], [], []>} : vector<8x256xbf16>, vector<256x768xbf16>, vector<8x768xf32> -> vector<8x768xf32>
    %23 = vector.extract_strided_slice %20 {offsets = [0, 0], sizes = [8, 256], strides = [1, 1]} : vector<8x768xf32> to vector<8x256xf32>
    %24 = vector.extract_strided_slice %22 {offsets = [0, 0], sizes = [8, 256], strides = [1, 1]} : vector<8x768xf32> to vector<8x256xf32>
    %25 = arith.addf %23, %24 : vector<8x256xf32>
    %cst_10 = arith.constant 5.000000e-01 : f32
    %26 = vector.broadcast %cst_10 : f32 to vector<8x256xf32>
    %27 = arith.mulf %26, %25 : vector<8x256xf32>
    %28 = math.tanh %27 : vector<8x256xf32>
    %cst_11 = arith.constant 5.000000e-01 : f32
    %29 = vector.broadcast %cst_11 : f32 to vector<8x256xf32>
    %30 = arith.mulf %29, %28 : vector<8x256xf32>
    %cst_12 = arith.constant 5.000000e-01 : f32
    %31 = vector.broadcast %cst_12 : f32 to vector<8x256xf32>
    %32 = arith.addf %30, %31 : vector<8x256xf32>
    %33 = vector.extract_strided_slice %20 {offsets = [0, 256], sizes = [8, 256], strides = [1, 1]} : vector<8x768xf32> to vector<8x256xf32>
    %34 = vector.extract_strided_slice %22 {offsets = [0, 256], sizes = [8, 256], strides = [1, 1]} : vector<8x768xf32> to vector<8x256xf32>
    %35 = arith.addf %33, %34 : vector<8x256xf32>
    %cst_13 = arith.constant 5.000000e-01 : f32
    %36 = vector.broadcast %cst_13 : f32 to vector<8x256xf32>
    %37 = arith.mulf %36, %35 : vector<8x256xf32>
    %38 = math.tanh %37 : vector<8x256xf32>
    %cst_14 = arith.constant 5.000000e-01 : f32
    %39 = vector.broadcast %cst_14 : f32 to vector<8x256xf32>
    %40 = arith.mulf %39, %38 : vector<8x256xf32>
    %cst_15 = arith.constant 5.000000e-01 : f32
    %41 = vector.broadcast %cst_15 : f32 to vector<8x256xf32>
    %42 = arith.addf %40, %41 : vector<8x256xf32>
    %43 = vector.extract_strided_slice %20 {offsets = [0, 512], sizes = [8, 256], strides = [1, 1]} : vector<8x768xf32> to vector<8x256xf32>
    %44 = vector.extract_strided_slice %22 {offsets = [0, 512], sizes = [8, 256], strides = [1, 1]} : vector<8x768xf32> to vector<8x256xf32>
    %45 = vector.broadcast %5 : vector<1x256xf32> to vector<8x256xf32>
    %46 = arith.addf %44, %45 : vector<8x256xf32>
    %47 = arith.mulf %32, %46 : vector<8x256xf32>
    %48 = arith.addf %43, %47 : vector<8x256xf32>
    %49 = math.tanh %48 : vector<8x256xf32>
    %cst_16 = arith.constant 1.000000e+00 : f32
    %50 = vector.broadcast %cst_16 : f32 to vector<8x256xf32>
    %51 = arith.subf %50, %42 : vector<8x256xf32>
    %52 = arith.mulf %51, %49 : vector<8x256xf32>
    %53 = arith.mulf %42, %6 : vector<8x256xf32>
    %54 = arith.addf %52, %53 : vector<8x256xf32>
    %c1_i32 = arith.constant 1 : i32
    %55 = arith.index_cast %c1_i32 : i32 to index
    %c0_17 = arith.constant 0 : index
    %c0_18 = arith.constant 0 : index
    %56 = vector.load %arg0[%55, %c0_17, %c0_18] : memref<8x8x2xf32, #tpu.memory_space<vmem>>, vector<1x8x2xf32>
    %57 = vector.shape_cast %56 : vector<1x8x2xf32> to vector<8x2xf32>
    %58 = vector.extract_strided_slice %57 {offsets = [0, 0], sizes = [8, 1], strides = [1, 1]} : vector<8x2xf32> to vector<8x1xf32>
    %59 = vector.broadcast %58 : vector<8x1xf32> to vector<8x768xf32>
    %60 = vector.broadcast %1 : vector<1x768xf32> to vector<8x768xf32>
    %61 = arith.mulf %59, %60 : vector<8x768xf32>
    %62 = vector.extract_strided_slice %57 {offsets = [0, 1], sizes = [8, 1], strides = [1, 1]} : vector<8x2xf32> to vector<8x1xf32>
    %63 = vector.broadcast %62 : vector<8x1xf32> to vector<8x768xf32>
    %64 = vector.broadcast %2 : vector<1x768xf32> to vector<8x768xf32>
    %65 = arith.mulf %63, %64 : vector<8x768xf32>
    %66 = arith.addf %61, %65 : vector<8x768xf32>
    %67 = vector.broadcast %3 : vector<1x768xf32> to vector<8x768xf32>
    %68 = arith.addf %66, %67 : vector<8x768xf32>
    %69 = arith.truncf %54 : vector<8x256xf32> to vector<8x256xbf16>
    %cst_19 = arith.constant dense<0.000000e+00> : vector<8x768xf32>
    %70 = tpu.matmul %69, %4, %cst_19 {dimension_numbers = #tpu.dot_dimension_numbers<[1], [0], [0], [1], [0, 0, 1, 1], [], []>} : vector<8x256xbf16>, vector<256x768xbf16>, vector<8x768xf32> -> vector<8x768xf32>
    %71 = vector.extract_strided_slice %68 {offsets = [0, 0], sizes = [8, 256], strides = [1, 1]} : vector<8x768xf32> to vector<8x256xf32>
    %72 = vector.extract_strided_slice %70 {offsets = [0, 0], sizes = [8, 256], strides = [1, 1]} : vector<8x768xf32> to vector<8x256xf32>
    %73 = arith.addf %71, %72 : vector<8x256xf32>
    %cst_20 = arith.constant 5.000000e-01 : f32
    %74 = vector.broadcast %cst_20 : f32 to vector<8x256xf32>
    %75 = arith.mulf %74, %73 : vector<8x256xf32>
    %76 = math.tanh %75 : vector<8x256xf32>
    %cst_21 = arith.constant 5.000000e-01 : f32
    %77 = vector.broadcast %cst_21 : f32 to vector<8x256xf32>
    %78 = arith.mulf %77, %76 : vector<8x256xf32>
    %cst_22 = arith.constant 5.000000e-01 : f32
    %79 = vector.broadcast %cst_22 : f32 to vector<8x256xf32>
    %80 = arith.addf %78, %79 : vector<8x256xf32>
    %81 = vector.extract_strided_slice %68 {offsets = [0, 256], sizes = [8, 256], strides = [1, 1]} : vector<8x768xf32> to vector<8x256xf32>
    %82 = vector.extract_strided_slice %70 {offsets = [0, 256], sizes = [8, 256], strides = [1, 1]} : vector<8x768xf32> to vector<8x256xf32>
    %83 = arith.addf %81, %82 : vector<8x256xf32>
    %cst_23 = arith.constant 5.000000e-01 : f32
    %84 = vector.broadcast %cst_23 : f32 to vector<8x256xf32>
    %85 = arith.mulf %84, %83 : vector<8x256xf32>
    %86 = math.tanh %85 : vector<8x256xf32>
    %cst_24 = arith.constant 5.000000e-01 : f32
    %87 = vector.broadcast %cst_24 : f32 to vector<8x256xf32>
    %88 = arith.mulf %87, %86 : vector<8x256xf32>
    %cst_25 = arith.constant 5.000000e-01 : f32
    %89 = vector.broadcast %cst_25 : f32 to vector<8x256xf32>
    %90 = arith.addf %88, %89 : vector<8x256xf32>
    %91 = vector.extract_strided_slice %68 {offsets = [0, 512], sizes = [8, 256], strides = [1, 1]} : vector<8x768xf32> to vector<8x256xf32>
    %92 = vector.extract_strided_slice %70 {offsets = [0, 512], sizes = [8, 256], strides = [1, 1]} : vector<8x768xf32> to vector<8x256xf32>
    %93 = vector.broadcast %5 : vector<1x256xf32> to vector<8x256xf32>
    %94 = arith.addf %92, %93 : vector<8x256xf32>
    %95 = arith.mulf %80, %94 : vector<8x256xf32>
    %96 = arith.addf %91, %95 : vector<8x256xf32>
    %97 = math.tanh %96 : vector<8x256xf32>
    %cst_26 = arith.constant 1.000000e+00 : f32
    %98 = vector.broadcast %cst_26 : f32 to vector<8x256xf32>
    %99 = arith.subf %98, %90 : vector<8x256xf32>
    %100 = arith.mulf %99, %97 : vector<8x256xf32>
    %101 = arith.mulf %90, %54 : vector<8x256xf32>
    %102 = arith.addf %100, %101 : vector<8x256xf32>
    %c2_i32 = arith.constant 2 : i32
    %103 = arith.index_cast %c2_i32 : i32 to index
    %c0_27 = arith.constant 0 : index
    %c0_28 = arith.constant 0 : index
    %104 = vector.load %arg0[%103, %c0_27, %c0_28] : memref<8x8x2xf32, #tpu.memory_space<vmem>>, vector<1x8x2xf32>
    %105 = vector.shape_cast %104 : vector<1x8x2xf32> to vector<8x2xf32>
    %106 = vector.extract_strided_slice %105 {offsets = [0, 0], sizes = [8, 1], strides = [1, 1]} : vector<8x2xf32> to vector<8x1xf32>
    %107 = vector.broadcast %106 : vector<8x1xf32> to vector<8x768xf32>
    %108 = vector.broadcast %1 : vector<1x768xf32> to vector<8x768xf32>
    %109 = arith.mulf %107, %108 : vector<8x768xf32>
    %110 = vector.extract_strided_slice %105 {offsets = [0, 1], sizes = [8, 1], strides = [1, 1]} : vector<8x2xf32> to vector<8x1xf32>
    %111 = vector.broadcast %110 : vector<8x1xf32> to vector<8x768xf32>
    %112 = vector.broadcast %2 : vector<1x768xf32> to vector<8x768xf32>
    %113 = arith.mulf %111, %112 : vector<8x768xf32>
    %114 = arith.addf %109, %113 : vector<8x768xf32>
    %115 = vector.broadcast %3 : vector<1x768xf32> to vector<8x768xf32>
    %116 = arith.addf %114, %115 : vector<8x768xf32>
    %117 = arith.truncf %102 : vector<8x256xf32> to vector<8x256xbf16>
    %cst_29 = arith.constant dense<0.000000e+00> : vector<8x768xf32>
    %118 = tpu.matmul %117, %4, %cst_29 {dimension_numbers = #tpu.dot_dimension_numbers<[1], [0], [0], [1], [0, 0, 1, 1], [], []>} : vector<8x256xbf16>, vector<256x768xbf16>, vector<8x768xf32> -> vector<8x768xf32>
    %119 = vector.extract_strided_slice %116 {offsets = [0, 0], sizes = [8, 256], strides = [1, 1]} : vector<8x768xf32> to vector<8x256xf32>
    %120 = vector.extract_strided_slice %118 {offsets = [0, 0], sizes = [8, 256], strides = [1, 1]} : vector<8x768xf32> to vector<8x256xf32>
    %121 = arith.addf %119, %120 : vector<8x256xf32>
    %cst_30 = arith.constant 5.000000e-01 : f32
    %122 = vector.broadcast %cst_30 : f32 to vector<8x256xf32>
    %123 = arith.mulf %122, %121 : vector<8x256xf32>
    %124 = math.tanh %123 : vector<8x256xf32>
    %cst_31 = arith.constant 5.000000e-01 : f32
    %125 = vector.broadcast %cst_31 : f32 to vector<8x256xf32>
    %126 = arith.mulf %125, %124 : vector<8x256xf32>
    %cst_32 = arith.constant 5.000000e-01 : f32
    %127 = vector.broadcast %cst_32 : f32 to vector<8x256xf32>
    %128 = arith.addf %126, %127 : vector<8x256xf32>
    %129 = vector.extract_strided_slice %116 {offsets = [0, 256], sizes = [8, 256], strides = [1, 1]} : vector<8x768xf32> to vector<8x256xf32>
    %130 = vector.extract_strided_slice %118 {offsets = [0, 256], sizes = [8, 256], strides = [1, 1]} : vector<8x768xf32> to vector<8x256xf32>
    %131 = arith.addf %129, %130 : vector<8x256xf32>
    %cst_33 = arith.constant 5.000000e-01 : f32
    %132 = vector.broadcast %cst_33 : f32 to vector<8x256xf32>
    %133 = arith.mulf %132, %131 : vector<8x256xf32>
    %134 = math.tanh %133 : vector<8x256xf32>
    %cst_34 = arith.constant 5.000000e-01 : f32
    %135 = vector.broadcast %cst_34 : f32 to vector<8x256xf32>
    %136 = arith.mulf %135, %134 : vector<8x256xf32>
    %cst_35 = arith.constant 5.000000e-01 : f32
    %137 = vector.broadcast %cst_35 : f32 to vector<8x256xf32>
    %138 = arith.addf %136, %137 : vector<8x256xf32>
    %139 = vector.extract_strided_slice %116 {offsets = [0, 512], sizes = [8, 256], strides = [1, 1]} : vector<8x768xf32> to vector<8x256xf32>
    %140 = vector.extract_strided_slice %118 {offsets = [0, 512], sizes = [8, 256], strides = [1, 1]} : vector<8x768xf32> to vector<8x256xf32>
    %141 = vector.broadcast %5 : vector<1x256xf32> to vector<8x256xf32>
    %142 = arith.addf %140, %141 : vector<8x256xf32>
    %143 = arith.mulf %128, %142 : vector<8x256xf32>
    %144 = arith.addf %139, %143 : vector<8x256xf32>
    %145 = math.tanh %144 : vector<8x256xf32>
    %cst_36 = arith.constant 1.000000e+00 : f32
    %146 = vector.broadcast %cst_36 : f32 to vector<8x256xf32>
    %147 = arith.subf %146, %138 : vector<8x256xf32>
    %148 = arith.mulf %147, %145 : vector<8x256xf32>
    %149 = arith.mulf %138, %102 : vector<8x256xf32>
    %150 = arith.addf %148, %149 : vector<8x256xf32>
    %c3_i32 = arith.constant 3 : i32
    %151 = arith.index_cast %c3_i32 : i32 to index
    %c0_37 = arith.constant 0 : index
    %c0_38 = arith.constant 0 : index
    %152 = vector.load %arg0[%151, %c0_37, %c0_38] : memref<8x8x2xf32, #tpu.memory_space<vmem>>, vector<1x8x2xf32>
    %153 = vector.shape_cast %152 : vector<1x8x2xf32> to vector<8x2xf32>
    %154 = vector.extract_strided_slice %153 {offsets = [0, 0], sizes = [8, 1], strides = [1, 1]} : vector<8x2xf32> to vector<8x1xf32>
    %155 = vector.broadcast %154 : vector<8x1xf32> to vector<8x768xf32>
    %156 = vector.broadcast %1 : vector<1x768xf32> to vector<8x768xf32>
    %157 = arith.mulf %155, %156 : vector<8x768xf32>
    %158 = vector.extract_strided_slice %153 {offsets = [0, 1], sizes = [8, 1], strides = [1, 1]} : vector<8x2xf32> to vector<8x1xf32>
    %159 = vector.broadcast %158 : vector<8x1xf32> to vector<8x768xf32>
    %160 = vector.broadcast %2 : vector<1x768xf32> to vector<8x768xf32>
    %161 = arith.mulf %159, %160 : vector<8x768xf32>
    %162 = arith.addf %157, %161 : vector<8x768xf32>
    %163 = vector.broadcast %3 : vector<1x768xf32> to vector<8x768xf32>
    %164 = arith.addf %162, %163 : vector<8x768xf32>
    %165 = arith.truncf %150 : vector<8x256xf32> to vector<8x256xbf16>
    %cst_39 = arith.constant dense<0.000000e+00> : vector<8x768xf32>
    %166 = tpu.matmul %165, %4, %cst_39 {dimension_numbers = #tpu.dot_dimension_numbers<[1], [0], [0], [1], [0, 0, 1, 1], [], []>} : vector<8x256xbf16>, vector<256x768xbf16>, vector<8x768xf32> -> vector<8x768xf32>
    %167 = vector.extract_strided_slice %164 {offsets = [0, 0], sizes = [8, 256], strides = [1, 1]} : vector<8x768xf32> to vector<8x256xf32>
    %168 = vector.extract_strided_slice %166 {offsets = [0, 0], sizes = [8, 256], strides = [1, 1]} : vector<8x768xf32> to vector<8x256xf32>
    %169 = arith.addf %167, %168 : vector<8x256xf32>
    %cst_40 = arith.constant 5.000000e-01 : f32
    %170 = vector.broadcast %cst_40 : f32 to vector<8x256xf32>
    %171 = arith.mulf %170, %169 : vector<8x256xf32>
    %172 = math.tanh %171 : vector<8x256xf32>
    %cst_41 = arith.constant 5.000000e-01 : f32
    %173 = vector.broadcast %cst_41 : f32 to vector<8x256xf32>
    %174 = arith.mulf %173, %172 : vector<8x256xf32>
    %cst_42 = arith.constant 5.000000e-01 : f32
    %175 = vector.broadcast %cst_42 : f32 to vector<8x256xf32>
    %176 = arith.addf %174, %175 : vector<8x256xf32>
    %177 = vector.extract_strided_slice %164 {offsets = [0, 256], sizes = [8, 256], strides = [1, 1]} : vector<8x768xf32> to vector<8x256xf32>
    %178 = vector.extract_strided_slice %166 {offsets = [0, 256], sizes = [8, 256], strides = [1, 1]} : vector<8x768xf32> to vector<8x256xf32>
    %179 = arith.addf %177, %178 : vector<8x256xf32>
    %cst_43 = arith.constant 5.000000e-01 : f32
    %180 = vector.broadcast %cst_43 : f32 to vector<8x256xf32>
    %181 = arith.mulf %180, %179 : vector<8x256xf32>
    %182 = math.tanh %181 : vector<8x256xf32>
    %cst_44 = arith.constant 5.000000e-01 : f32
    %183 = vector.broadcast %cst_44 : f32 to vector<8x256xf32>
    %184 = arith.mulf %183, %182 : vector<8x256xf32>
    %cst_45 = arith.constant 5.000000e-01 : f32
    %185 = vector.broadcast %cst_45 : f32 to vector<8x256xf32>
    %186 = arith.addf %184, %185 : vector<8x256xf32>
    %187 = vector.extract_strided_slice %164 {offsets = [0, 512], sizes = [8, 256], strides = [1, 1]} : vector<8x768xf32> to vector<8x256xf32>
    %188 = vector.extract_strided_slice %166 {offsets = [0, 512], sizes = [8, 256], strides = [1, 1]} : vector<8x768xf32> to vector<8x256xf32>
    %189 = vector.broadcast %5 : vector<1x256xf32> to vector<8x256xf32>
    %190 = arith.addf %188, %189 : vector<8x256xf32>
    %191 = arith.mulf %176, %190 : vector<8x256xf32>
    %192 = arith.addf %187, %191 : vector<8x256xf32>
    %193 = math.tanh %192 : vector<8x256xf32>
    %cst_46 = arith.constant 1.000000e+00 : f32
    %194 = vector.broadcast %cst_46 : f32 to vector<8x256xf32>
    %195 = arith.subf %194, %186 : vector<8x256xf32>
    %196 = arith.mulf %195, %193 : vector<8x256xf32>
    %197 = arith.mulf %186, %150 : vector<8x256xf32>
    %198 = arith.addf %196, %197 : vector<8x256xf32>
    %c4_i32 = arith.constant 4 : i32
    %199 = arith.index_cast %c4_i32 : i32 to index
    %c0_47 = arith.constant 0 : index
    %c0_48 = arith.constant 0 : index
    %200 = vector.load %arg0[%199, %c0_47, %c0_48] : memref<8x8x2xf32, #tpu.memory_space<vmem>>, vector<1x8x2xf32>
    %201 = vector.shape_cast %200 : vector<1x8x2xf32> to vector<8x2xf32>
    %202 = vector.extract_strided_slice %201 {offsets = [0, 0], sizes = [8, 1], strides = [1, 1]} : vector<8x2xf32> to vector<8x1xf32>
    %203 = vector.broadcast %202 : vector<8x1xf32> to vector<8x768xf32>
    %204 = vector.broadcast %1 : vector<1x768xf32> to vector<8x768xf32>
    %205 = arith.mulf %203, %204 : vector<8x768xf32>
    %206 = vector.extract_strided_slice %201 {offsets = [0, 1], sizes = [8, 1], strides = [1, 1]} : vector<8x2xf32> to vector<8x1xf32>
    %207 = vector.broadcast %206 : vector<8x1xf32> to vector<8x768xf32>
    %208 = vector.broadcast %2 : vector<1x768xf32> to vector<8x768xf32>
    %209 = arith.mulf %207, %208 : vector<8x768xf32>
    %210 = arith.addf %205, %209 : vector<8x768xf32>
    %211 = vector.broadcast %3 : vector<1x768xf32> to vector<8x768xf32>
    %212 = arith.addf %210, %211 : vector<8x768xf32>
    %213 = arith.truncf %198 : vector<8x256xf32> to vector<8x256xbf16>
    %cst_49 = arith.constant dense<0.000000e+00> : vector<8x768xf32>
    %214 = tpu.matmul %213, %4, %cst_49 {dimension_numbers = #tpu.dot_dimension_numbers<[1], [0], [0], [1], [0, 0, 1, 1], [], []>} : vector<8x256xbf16>, vector<256x768xbf16>, vector<8x768xf32> -> vector<8x768xf32>
    %215 = vector.extract_strided_slice %212 {offsets = [0, 0], sizes = [8, 256], strides = [1, 1]} : vector<8x768xf32> to vector<8x256xf32>
    %216 = vector.extract_strided_slice %214 {offsets = [0, 0], sizes = [8, 256], strides = [1, 1]} : vector<8x768xf32> to vector<8x256xf32>
    %217 = arith.addf %215, %216 : vector<8x256xf32>
    %cst_50 = arith.constant 5.000000e-01 : f32
    %218 = vector.broadcast %cst_50 : f32 to vector<8x256xf32>
    %219 = arith.mulf %218, %217 : vector<8x256xf32>
    %220 = math.tanh %219 : vector<8x256xf32>
    %cst_51 = arith.constant 5.000000e-01 : f32
    %221 = vector.broadcast %cst_51 : f32 to vector<8x256xf32>
    %222 = arith.mulf %221, %220 : vector<8x256xf32>
    %cst_52 = arith.constant 5.000000e-01 : f32
    %223 = vector.broadcast %cst_52 : f32 to vector<8x256xf32>
    %224 = arith.addf %222, %223 : vector<8x256xf32>
    %225 = vector.extract_strided_slice %212 {offsets = [0, 256], sizes = [8, 256], strides = [1, 1]} : vector<8x768xf32> to vector<8x256xf32>
    %226 = vector.extract_strided_slice %214 {offsets = [0, 256], sizes = [8, 256], strides = [1, 1]} : vector<8x768xf32> to vector<8x256xf32>
    %227 = arith.addf %225, %226 : vector<8x256xf32>
    %cst_53 = arith.constant 5.000000e-01 : f32
    %228 = vector.broadcast %cst_53 : f32 to vector<8x256xf32>
    %229 = arith.mulf %228, %227 : vector<8x256xf32>
    %230 = math.tanh %229 : vector<8x256xf32>
    %cst_54 = arith.constant 5.000000e-01 : f32
    %231 = vector.broadcast %cst_54 : f32 to vector<8x256xf32>
    %232 = arith.mulf %231, %230 : vector<8x256xf32>
    %cst_55 = arith.constant 5.000000e-01 : f32
    %233 = vector.broadcast %cst_55 : f32 to vector<8x256xf32>
    %234 = arith.addf %232, %233 : vector<8x256xf32>
    %235 = vector.extract_strided_slice %212 {offsets = [0, 512], sizes = [8, 256], strides = [1, 1]} : vector<8x768xf32> to vector<8x256xf32>
    %236 = vector.extract_strided_slice %214 {offsets = [0, 512], sizes = [8, 256], strides = [1, 1]} : vector<8x768xf32> to vector<8x256xf32>
    %237 = vector.broadcast %5 : vector<1x256xf32> to vector<8x256xf32>
    %238 = arith.addf %236, %237 : vector<8x256xf32>
    %239 = arith.mulf %224, %238 : vector<8x256xf32>
    %240 = arith.addf %235, %239 : vector<8x256xf32>
    %241 = math.tanh %240 : vector<8x256xf32>
    %cst_56 = arith.constant 1.000000e+00 : f32
    %242 = vector.broadcast %cst_56 : f32 to vector<8x256xf32>
    %243 = arith.subf %242, %234 : vector<8x256xf32>
    %244 = arith.mulf %243, %241 : vector<8x256xf32>
    %245 = arith.mulf %234, %198 : vector<8x256xf32>
    %246 = arith.addf %244, %245 : vector<8x256xf32>
    %c5_i32 = arith.constant 5 : i32
    %247 = arith.index_cast %c5_i32 : i32 to index
    %c0_57 = arith.constant 0 : index
    %c0_58 = arith.constant 0 : index
    %248 = vector.load %arg0[%247, %c0_57, %c0_58] : memref<8x8x2xf32, #tpu.memory_space<vmem>>, vector<1x8x2xf32>
    %249 = vector.shape_cast %248 : vector<1x8x2xf32> to vector<8x2xf32>
    %250 = vector.extract_strided_slice %249 {offsets = [0, 0], sizes = [8, 1], strides = [1, 1]} : vector<8x2xf32> to vector<8x1xf32>
    %251 = vector.broadcast %250 : vector<8x1xf32> to vector<8x768xf32>
    %252 = vector.broadcast %1 : vector<1x768xf32> to vector<8x768xf32>
    %253 = arith.mulf %251, %252 : vector<8x768xf32>
    %254 = vector.extract_strided_slice %249 {offsets = [0, 1], sizes = [8, 1], strides = [1, 1]} : vector<8x2xf32> to vector<8x1xf32>
    %255 = vector.broadcast %254 : vector<8x1xf32> to vector<8x768xf32>
    %256 = vector.broadcast %2 : vector<1x768xf32> to vector<8x768xf32>
    %257 = arith.mulf %255, %256 : vector<8x768xf32>
    %258 = arith.addf %253, %257 : vector<8x768xf32>
    %259 = vector.broadcast %3 : vector<1x768xf32> to vector<8x768xf32>
    %260 = arith.addf %258, %259 : vector<8x768xf32>
    %261 = arith.truncf %246 : vector<8x256xf32> to vector<8x256xbf16>
    %cst_59 = arith.constant dense<0.000000e+00> : vector<8x768xf32>
    %262 = tpu.matmul %261, %4, %cst_59 {dimension_numbers = #tpu.dot_dimension_numbers<[1], [0], [0], [1], [0, 0, 1, 1], [], []>} : vector<8x256xbf16>, vector<256x768xbf16>, vector<8x768xf32> -> vector<8x768xf32>
    %263 = vector.extract_strided_slice %260 {offsets = [0, 0], sizes = [8, 256], strides = [1, 1]} : vector<8x768xf32> to vector<8x256xf32>
    %264 = vector.extract_strided_slice %262 {offsets = [0, 0], sizes = [8, 256], strides = [1, 1]} : vector<8x768xf32> to vector<8x256xf32>
    %265 = arith.addf %263, %264 : vector<8x256xf32>
    %cst_60 = arith.constant 5.000000e-01 : f32
    %266 = vector.broadcast %cst_60 : f32 to vector<8x256xf32>
    %267 = arith.mulf %266, %265 : vector<8x256xf32>
    %268 = math.tanh %267 : vector<8x256xf32>
    %cst_61 = arith.constant 5.000000e-01 : f32
    %269 = vector.broadcast %cst_61 : f32 to vector<8x256xf32>
    %270 = arith.mulf %269, %268 : vector<8x256xf32>
    %cst_62 = arith.constant 5.000000e-01 : f32
    %271 = vector.broadcast %cst_62 : f32 to vector<8x256xf32>
    %272 = arith.addf %270, %271 : vector<8x256xf32>
    %273 = vector.extract_strided_slice %260 {offsets = [0, 256], sizes = [8, 256], strides = [1, 1]} : vector<8x768xf32> to vector<8x256xf32>
    %274 = vector.extract_strided_slice %262 {offsets = [0, 256], sizes = [8, 256], strides = [1, 1]} : vector<8x768xf32> to vector<8x256xf32>
    %275 = arith.addf %273, %274 : vector<8x256xf32>
    %cst_63 = arith.constant 5.000000e-01 : f32
    %276 = vector.broadcast %cst_63 : f32 to vector<8x256xf32>
    %277 = arith.mulf %276, %275 : vector<8x256xf32>
    %278 = math.tanh %277 : vector<8x256xf32>
    %cst_64 = arith.constant 5.000000e-01 : f32
    %279 = vector.broadcast %cst_64 : f32 to vector<8x256xf32>
    %280 = arith.mulf %279, %278 : vector<8x256xf32>
    %cst_65 = arith.constant 5.000000e-01 : f32
    %281 = vector.broadcast %cst_65 : f32 to vector<8x256xf32>
    %282 = arith.addf %280, %281 : vector<8x256xf32>
    %283 = vector.extract_strided_slice %260 {offsets = [0, 512], sizes = [8, 256], strides = [1, 1]} : vector<8x768xf32> to vector<8x256xf32>
    %284 = vector.extract_strided_slice %262 {offsets = [0, 512], sizes = [8, 256], strides = [1, 1]} : vector<8x768xf32> to vector<8x256xf32>
    %285 = vector.broadcast %5 : vector<1x256xf32> to vector<8x256xf32>
    %286 = arith.addf %284, %285 : vector<8x256xf32>
    %287 = arith.mulf %272, %286 : vector<8x256xf32>
    %288 = arith.addf %283, %287 : vector<8x256xf32>
    %289 = math.tanh %288 : vector<8x256xf32>
    %cst_66 = arith.constant 1.000000e+00 : f32
    %290 = vector.broadcast %cst_66 : f32 to vector<8x256xf32>
    %291 = arith.subf %290, %282 : vector<8x256xf32>
    %292 = arith.mulf %291, %289 : vector<8x256xf32>
    %293 = arith.mulf %282, %246 : vector<8x256xf32>
    %294 = arith.addf %292, %293 : vector<8x256xf32>
    %c6_i32 = arith.constant 6 : i32
    %295 = arith.index_cast %c6_i32 : i32 to index
    %c0_67 = arith.constant 0 : index
    %c0_68 = arith.constant 0 : index
    %296 = vector.load %arg0[%295, %c0_67, %c0_68] : memref<8x8x2xf32, #tpu.memory_space<vmem>>, vector<1x8x2xf32>
    %297 = vector.shape_cast %296 : vector<1x8x2xf32> to vector<8x2xf32>
    %298 = vector.extract_strided_slice %297 {offsets = [0, 0], sizes = [8, 1], strides = [1, 1]} : vector<8x2xf32> to vector<8x1xf32>
    %299 = vector.broadcast %298 : vector<8x1xf32> to vector<8x768xf32>
    %300 = vector.broadcast %1 : vector<1x768xf32> to vector<8x768xf32>
    %301 = arith.mulf %299, %300 : vector<8x768xf32>
    %302 = vector.extract_strided_slice %297 {offsets = [0, 1], sizes = [8, 1], strides = [1, 1]} : vector<8x2xf32> to vector<8x1xf32>
    %303 = vector.broadcast %302 : vector<8x1xf32> to vector<8x768xf32>
    %304 = vector.broadcast %2 : vector<1x768xf32> to vector<8x768xf32>
    %305 = arith.mulf %303, %304 : vector<8x768xf32>
    %306 = arith.addf %301, %305 : vector<8x768xf32>
    %307 = vector.broadcast %3 : vector<1x768xf32> to vector<8x768xf32>
    %308 = arith.addf %306, %307 : vector<8x768xf32>
    %309 = arith.truncf %294 : vector<8x256xf32> to vector<8x256xbf16>
    %cst_69 = arith.constant dense<0.000000e+00> : vector<8x768xf32>
    %310 = tpu.matmul %309, %4, %cst_69 {dimension_numbers = #tpu.dot_dimension_numbers<[1], [0], [0], [1], [0, 0, 1, 1], [], []>} : vector<8x256xbf16>, vector<256x768xbf16>, vector<8x768xf32> -> vector<8x768xf32>
    %311 = vector.extract_strided_slice %308 {offsets = [0, 0], sizes = [8, 256], strides = [1, 1]} : vector<8x768xf32> to vector<8x256xf32>
    %312 = vector.extract_strided_slice %310 {offsets = [0, 0], sizes = [8, 256], strides = [1, 1]} : vector<8x768xf32> to vector<8x256xf32>
    %313 = arith.addf %311, %312 : vector<8x256xf32>
    %cst_70 = arith.constant 5.000000e-01 : f32
    %314 = vector.broadcast %cst_70 : f32 to vector<8x256xf32>
    %315 = arith.mulf %314, %313 : vector<8x256xf32>
    %316 = math.tanh %315 : vector<8x256xf32>
    %cst_71 = arith.constant 5.000000e-01 : f32
    %317 = vector.broadcast %cst_71 : f32 to vector<8x256xf32>
    %318 = arith.mulf %317, %316 : vector<8x256xf32>
    %cst_72 = arith.constant 5.000000e-01 : f32
    %319 = vector.broadcast %cst_72 : f32 to vector<8x256xf32>
    %320 = arith.addf %318, %319 : vector<8x256xf32>
    %321 = vector.extract_strided_slice %308 {offsets = [0, 256], sizes = [8, 256], strides = [1, 1]} : vector<8x768xf32> to vector<8x256xf32>
    %322 = vector.extract_strided_slice %310 {offsets = [0, 256], sizes = [8, 256], strides = [1, 1]} : vector<8x768xf32> to vector<8x256xf32>
    %323 = arith.addf %321, %322 : vector<8x256xf32>
    %cst_73 = arith.constant 5.000000e-01 : f32
    %324 = vector.broadcast %cst_73 : f32 to vector<8x256xf32>
    %325 = arith.mulf %324, %323 : vector<8x256xf32>
    %326 = math.tanh %325 : vector<8x256xf32>
    %cst_74 = arith.constant 5.000000e-01 : f32
    %327 = vector.broadcast %cst_74 : f32 to vector<8x256xf32>
    %328 = arith.mulf %327, %326 : vector<8x256xf32>
    %cst_75 = arith.constant 5.000000e-01 : f32
    %329 = vector.broadcast %cst_75 : f32 to vector<8x256xf32>
    %330 = arith.addf %328, %329 : vector<8x256xf32>
    %331 = vector.extract_strided_slice %308 {offsets = [0, 512], sizes = [8, 256], strides = [1, 1]} : vector<8x768xf32> to vector<8x256xf32>
    %332 = vector.extract_strided_slice %310 {offsets = [0, 512], sizes = [8, 256], strides = [1, 1]} : vector<8x768xf32> to vector<8x256xf32>
    %333 = vector.broadcast %5 : vector<1x256xf32> to vector<8x256xf32>
    %334 = arith.addf %332, %333 : vector<8x256xf32>
    %335 = arith.mulf %320, %334 : vector<8x256xf32>
    %336 = arith.addf %331, %335 : vector<8x256xf32>
    %337 = math.tanh %336 : vector<8x256xf32>
    %cst_76 = arith.constant 1.000000e+00 : f32
    %338 = vector.broadcast %cst_76 : f32 to vector<8x256xf32>
    %339 = arith.subf %338, %330 : vector<8x256xf32>
    %340 = arith.mulf %339, %337 : vector<8x256xf32>
    %341 = arith.mulf %330, %294 : vector<8x256xf32>
    %342 = arith.addf %340, %341 : vector<8x256xf32>
    %c7_i32 = arith.constant 7 : i32
    %343 = arith.index_cast %c7_i32 : i32 to index
    %c0_77 = arith.constant 0 : index
    %c0_78 = arith.constant 0 : index
    %344 = vector.load %arg0[%343, %c0_77, %c0_78] : memref<8x8x2xf32, #tpu.memory_space<vmem>>, vector<1x8x2xf32>
    %345 = vector.shape_cast %344 : vector<1x8x2xf32> to vector<8x2xf32>
    %346 = vector.extract_strided_slice %345 {offsets = [0, 0], sizes = [8, 1], strides = [1, 1]} : vector<8x2xf32> to vector<8x1xf32>
    %347 = vector.broadcast %346 : vector<8x1xf32> to vector<8x768xf32>
    %348 = vector.broadcast %1 : vector<1x768xf32> to vector<8x768xf32>
    %349 = arith.mulf %347, %348 : vector<8x768xf32>
    %350 = vector.extract_strided_slice %345 {offsets = [0, 1], sizes = [8, 1], strides = [1, 1]} : vector<8x2xf32> to vector<8x1xf32>
    %351 = vector.broadcast %350 : vector<8x1xf32> to vector<8x768xf32>
    %352 = vector.broadcast %2 : vector<1x768xf32> to vector<8x768xf32>
    %353 = arith.mulf %351, %352 : vector<8x768xf32>
    %354 = arith.addf %349, %353 : vector<8x768xf32>
    %355 = vector.broadcast %3 : vector<1x768xf32> to vector<8x768xf32>
    %356 = arith.addf %354, %355 : vector<8x768xf32>
    %357 = arith.truncf %342 : vector<8x256xf32> to vector<8x256xbf16>
    %cst_79 = arith.constant dense<0.000000e+00> : vector<8x768xf32>
    %358 = tpu.matmul %357, %4, %cst_79 {dimension_numbers = #tpu.dot_dimension_numbers<[1], [0], [0], [1], [0, 0, 1, 1], [], []>} : vector<8x256xbf16>, vector<256x768xbf16>, vector<8x768xf32> -> vector<8x768xf32>
    %359 = vector.extract_strided_slice %356 {offsets = [0, 0], sizes = [8, 256], strides = [1, 1]} : vector<8x768xf32> to vector<8x256xf32>
    %360 = vector.extract_strided_slice %358 {offsets = [0, 0], sizes = [8, 256], strides = [1, 1]} : vector<8x768xf32> to vector<8x256xf32>
    %361 = arith.addf %359, %360 : vector<8x256xf32>
    %cst_80 = arith.constant 5.000000e-01 : f32
    %362 = vector.broadcast %cst_80 : f32 to vector<8x256xf32>
    %363 = arith.mulf %362, %361 : vector<8x256xf32>
    %364 = math.tanh %363 : vector<8x256xf32>
    %cst_81 = arith.constant 5.000000e-01 : f32
    %365 = vector.broadcast %cst_81 : f32 to vector<8x256xf32>
    %366 = arith.mulf %365, %364 : vector<8x256xf32>
    %cst_82 = arith.constant 5.000000e-01 : f32
    %367 = vector.broadcast %cst_82 : f32 to vector<8x256xf32>
    %368 = arith.addf %366, %367 : vector<8x256xf32>
    %369 = vector.extract_strided_slice %356 {offsets = [0, 256], sizes = [8, 256], strides = [1, 1]} : vector<8x768xf32> to vector<8x256xf32>
    %370 = vector.extract_strided_slice %358 {offsets = [0, 256], sizes = [8, 256], strides = [1, 1]} : vector<8x768xf32> to vector<8x256xf32>
    %371 = arith.addf %369, %370 : vector<8x256xf32>
    %cst_83 = arith.constant 5.000000e-01 : f32
    %372 = vector.broadcast %cst_83 : f32 to vector<8x256xf32>
    %373 = arith.mulf %372, %371 : vector<8x256xf32>
    %374 = math.tanh %373 : vector<8x256xf32>
    %cst_84 = arith.constant 5.000000e-01 : f32
    %375 = vector.broadcast %cst_84 : f32 to vector<8x256xf32>
    %376 = arith.mulf %375, %374 : vector<8x256xf32>
    %cst_85 = arith.constant 5.000000e-01 : f32
    %377 = vector.broadcast %cst_85 : f32 to vector<8x256xf32>
    %378 = arith.addf %376, %377 : vector<8x256xf32>
    %379 = vector.extract_strided_slice %356 {offsets = [0, 512], sizes = [8, 256], strides = [1, 1]} : vector<8x768xf32> to vector<8x256xf32>
    %380 = vector.extract_strided_slice %358 {offsets = [0, 512], sizes = [8, 256], strides = [1, 1]} : vector<8x768xf32> to vector<8x256xf32>
    %381 = vector.broadcast %5 : vector<1x256xf32> to vector<8x256xf32>
    %382 = arith.addf %380, %381 : vector<8x256xf32>
    %383 = arith.mulf %368, %382 : vector<8x256xf32>
    %384 = arith.addf %379, %383 : vector<8x256xf32>
    %385 = math.tanh %384 : vector<8x256xf32>
    %cst_86 = arith.constant 1.000000e+00 : f32
    %386 = vector.broadcast %cst_86 : f32 to vector<8x256xf32>
    %387 = arith.subf %386, %378 : vector<8x256xf32>
    %388 = arith.mulf %387, %385 : vector<8x256xf32>
    %389 = arith.mulf %378, %342 : vector<8x256xf32>
    %390 = arith.addf %388, %389 : vector<8x256xf32>
    %c8_i32 = arith.constant 8 : i32
    %c0_87 = arith.constant 0 : index
    %c0_88 = arith.constant 0 : index
    %391 = vector.load %arg5[%c0_87, %c0_88] : memref<8x256xf32, #tpu.memory_space<vmem>>, vector<8x256xf32>
    tpu.vector_store %arg5[%c0_87, %c0_88], %390 {strides = array<i32>} : memref<8x256xf32, #tpu.memory_space<vmem>>, vector<8x256xf32>,
    return
  }
}

</mosaic_0001>

<llo_original>
// kernel: motion_encoder_pallas.1
$region0: #{motion_encoder_pallas.1}
  #allocation0 [shape = 'u32[]', space=smem, size = 0x4, offset = 0x4, fixed_abs, tag = 'smem constant byte address 0x4 - core index']
  #allocation1 [shape = 'u32[144,128]{1,0:T(1,128)}', space=vmem, size = 0x12000, scoped, tag = 'internal scratch']
  %s0 = inlined_call_operand.vmem [shape: f32[8,8,2], index: 0, kind: input, shape index: {}]
  %s1 = inlined_call_operand.vmem [shape: f32[2,768], index: 1, kind: input, shape index: {}]
  %s2 = inlined_call_operand.vmem [shape: f32[1,768], index: 2, kind: input, shape index: {}]
  %s3 = inlined_call_operand.hbm [shape: bf16[256,768], index: 3, kind: input, shape index: {}]
  %s4 = inlined_call_operand.vmem [shape: f32[1,256], index: 4, kind: input, shape index: {}]
  %s5 = inlined_call_operand.hbm [shape: f32[8,256], index: 5, kind: output, shape index: {}]
  %s6 = sld [smem:[#allocation0]]
  $region34: #{motion_encoder_pallas.1} parent=0
    _
  %s8 = ssub.s32 1, %s6
  %s9 = scalar_select 0, %s8, %s6
  $region1: #{motion_encoder_pallas.1} parent=0
    #allocation2 [shape = 'u8[393216]{0}', space=vmem, size = 0x60000, scoped, tag = 'input window, operand 3, single buffered']
    #allocation3 [shape = 's32[1]{0}', space=sflag, size = 0x4, scoped, tag = 'scoped memory for motion_encoder_pallas.1']
    #allocation4 [shape = 's32[1]{0}', space=sflag, size = 0x4, scoped, tag = 'scoped memory for motion_encoder_pallas.1']
    #allocation5 [shape = 'u8[8192]{0}', space=vmem, size = 0x2000, scoped, tag = 'output window, operand 0, single buffered']
    %10 = vsyncpa [#allocation3], 0
    %11 = vsyncpa [#allocation4], 0
    // Predicated region
    $region2: #{motion_encoder_pallas.1} parent=1 // pred_check
      _
    $region3: #{motion_encoder_pallas.1} parent=1 // pred_check_branch
      %13 = sbr.rel (0) target = $region5
    $region4: #{motion_encoder_pallas.1} parent=1 // pred_region
      _
    $region5: #{motion_encoder_pallas.1} parent=1 // pred_fallthru
      _
    // Predicated region
    $region6: #{motion_encoder_pallas.1} parent=1 // pred_check
      _
    $region7: #{motion_encoder_pallas.1} parent=1 // pred_check_branch
      %15 = sbr.rel (0) target = $region9
    $region8: #{motion_encoder_pallas.1} parent=1 // pred_region
      _
    $region9: #{motion_encoder_pallas.1} parent=1 // pred_fallthru
      _
    // Predicated region
    $region10: #{motion_encoder_pallas.1} parent=1 // pred_check
      _
    $region11: #{motion_encoder_pallas.1} parent=1 // pred_check_branch
      %17 = sbr.rel (0) target = $region13
    $region12: #{motion_encoder_pallas.1} parent=1 // pred_region
      _
    $region13: #{motion_encoder_pallas.1} parent=1 // pred_fallthru
      _
    // Predicated region
    $region14: #{motion_encoder_pallas.1} parent=1 // pred_check
      _
    $region15: #{motion_encoder_pallas.1} parent=1 // pred_check_branch
      %19 = sbr.rel (0) target = $region17
    $region16: #{motion_encoder_pallas.1} parent=1 // pred_region
      %s21 = ssub.s32 12288, 12288
      %22 = vsyncadd [#allocation3], %s21
      %s23 = sshll.u32 [#allocation2], 4
      %s24 = int_to_ptr.vmem [resolvable:$true] %s23
      %29 = dma.hbm_to_vmem [thread:$0]  %s3, 12288, %s24, [#allocation3], 384, 384, 24
    $region17: #{motion_encoder_pallas.1} parent=1 // pred_fallthru
      _
    // Predicated region
    $region18: #{motion_encoder_pallas.1} parent=1 // pred_check
      _
    $region19: #{motion_encoder_pallas.1} parent=1 // pred_check_branch
      %31 = sbr.rel (0) target = $region21
    $region20: #{motion_encoder_pallas.1} parent=1 // pred_region
      _
    $region21: #{motion_encoder_pallas.1} parent=1 // pred_fallthru
      _
    // Predicated region
    $region22: #{motion_encoder_pallas.1} parent=1 // pred_check
      _
    $region23: #{motion_encoder_pallas.1} parent=1 // pred_check_branch
      %33 = sbr.rel (0) target = $region25
    $region24: #{motion_encoder_pallas.1} parent=1 // pred_region
      %34 = dma.done [#allocation3], 12288
    $region25: #{motion_encoder_pallas.1} parent=1 // pred_fallthru
      _
    %v36 = vld [vmem:[%s1] sm:$0xff]
    %v37 = vld [vmem:[%s1 + $0x8] sm:$0xf]
    %v38 = vld [vmem:[%s2] sm:$0x3f]
    %v39 = vld [vmem:[#allocation2] sm:$0xff]
    %v40 = vld [vmem:[#allocation2 + $0x8] sm:$0xff]
    %v41 = vld [vmem:[#allocation2 + $0x10] sm:$0xff]
    %v42 = vld [vmem:[#allocation2 + $0x18] sm:$0xff]
    %v43 = vld [vmem:[#allocation2 + $0x20] sm:$0xff]
    %v44 = vld [vmem:[#allocation2 + $0x28] sm:$0xff]
    %v45 = vld [vmem:[#allocation2 + $0x30] sm:$0xff]
    %v46 = vld [vmem:[#allocation2 + $0x38] sm:$0xff]
    %v47 = vld [vmem:[#allocation2 + $0x40] sm:$0xff]
    %v48 = vld [vmem:[#allocation2 + $0x48] sm:$0xff]
    %v49 = vld [vmem:[#allocation2 + $0x50] sm:$0xff]
    %v50 = vld [vmem:[#allocation2 + $0x58] sm:$0xff]
    %v51 = vld [vmem:[#allocation2 + $0x60] sm:$0xff]
    %v52 = vld [vmem:[#allocation2 + $0x68] sm:$0xff]
    %v53 = vld [vmem:[#allocation2 + $0x70] sm:$0xff]
    %v54 = vld [vmem:[#allocation2 + $0x78] sm:$0xff]
    %v55 = vld [vmem:[#allocation2 + $0x80] sm:$0xff]
    %v56 = vld [vmem:[#allocation2 + $0x88] sm:$0xff]
    %v57 = vld [vmem:[#allocation2 + $0x90] sm:$0xff]
    %v58 = vld [vmem:[#allocation2 + $0x98] sm:$0xff]
    %v59 = vld [vmem:[#allocation2 + $0xa0] sm:$0xff]
    %v60 = vld [vmem:[#allocation2 + $0xa8] sm:$0xff]
    %v61 = vld [vmem:[#allocation2 + $0xb0] sm:$0xff]
    %v62 = vld [vmem:[#allocation2 + $0xb8] sm:$0xff]
    %v63 = vld [vmem:[#allocation2 + $0xc0] sm:$0xff]
    %v64 = vld [vmem:[#allocation2 + $0xc8] sm:$0xff]
    %v65 = vld [vmem:[#allocation2 + $0xd0] sm:$0xff]
    %v66 = vld [vmem:[#allocation2 + $0xd8] sm:$0xff]
    %v67 = vld [vmem:[#allocation2 + $0xe0] sm:$0xff]
    %v68 = vld [vmem:[#allocation2 + $0xe8] sm:$0xff]
    %v69 = vld [vmem:[#allocation2 + $0xf0] sm:$0xff]
    %v70 = vld [vmem:[#allocation2 + $0xf8] sm:$0xff]
    %v71 = vld [vmem:[#allocation2 + $0x100] sm:$0xff]
    %v72 = vld [vmem:[#allocation2 + $0x108] sm:$0xff]
    %v73 = vld [vmem:[#allocation2 + $0x110] sm:$0xff]
    %v74 = vld [vmem:[#allocation2 + $0x118] sm:$0xff]
    %v75 = vld [vmem:[#allocation2 + $0x120] sm:$0xff]
    %v76 = vld [vmem:[#allocation2 + $0x128] sm:$0xff]
    %v77 = vld [vmem:[#allocation2 + $0x130] sm:$0xff]
    %v78 = vld [vmem:[#allocation2 + $0x138] sm:$0xff]
    %v79 = vld [vmem:[#allocation2 + $0x140] sm:$0xff]
    %v80 = vld [vmem:[#allocation2 + $0x148] sm:$0xff]
    %v81 = vld [vmem:[#allocation2 + $0x150] sm:$0xff]
    %v82 = vld [vmem:[#allocation2 + $0x158] sm:$0xff]
    %v83 = vld [vmem:[#allocation2 + $0x160] sm:$0xff]
    %v84 = vld [vmem:[#allocation2 + $0x168] sm:$0xff]
    %v85 = vld [vmem:[#allocation2 + $0x170] sm:$0xff]
    %v86 = vld [vmem:[#allocation2 + $0x178] sm:$0xff]
    %v87 = vld [vmem:[#allocation2 + $0x180] sm:$0xff]
    %v88 = vld [vmem:[#allocation2 + $0x188] sm:$0xff]
    %v89 = vld [vmem:[#allocation2 + $0x190] sm:$0xff]
    %v90 = vld [vmem:[#allocation2 + $0x198] sm:$0xff]
    %v91 = vld [vmem:[#allocation2 + $0x1a0] sm:$0xff]
    %v92 = vld [vmem:[#allocation2 + $0x1a8] sm:$0xff]
    %v93 = vld [vmem:[#allocation2 + $0x1b0] sm:$0xff]
    %v94 = vld [vmem:[#allocation2 + $0x1b8] sm:$0xff]
    %v95 = vld [vmem:[#allocation2 + $0x1c0] sm:$0xff]
    %v96 = vld [vmem:[#allocation2 + $0x1c8] sm:$0xff]
    %v97 = vld [vmem:[#allocation2 + $0x1d0] sm:$0xff]
    %v98 = vld [vmem:[#allocation2 + $0x1d8] sm:$0xff]
    %v99 = vld [vmem:[#allocation2 + $0x1e0] sm:$0xff]
    %v100 = vld [vmem:[#allocation2 + $0x1e8] sm:$0xff]
    %v101 = vld [vmem:[#allocation2 + $0x1f0] sm:$0xff]
    %v102 = vld [vmem:[#allocation2 + $0x1f8] sm:$0xff]
    %v103 = vld [vmem:[#allocation2 + $0x200] sm:$0xff]
    %v104 = vld [vmem:[#allocation2 + $0x208] sm:$0xff]
    %v105 = vld [vmem:[#allocation2 + $0x210] sm:$0xff]
    %v106 = vld [vmem:[#allocation2 + $0x218] sm:$0xff]
    %v107 = vld [vmem:[#allocation2 + $0x220] sm:$0xff]
    %v108 = vld [vmem:[#allocation2 + $0x228] sm:$0xff]
    %v109 = vld [vmem:[#allocation2 + $0x230] sm:$0xff]
    %v110 = vld [vmem:[#allocation2 + $0x238] sm:$0xff]
    %v111 = vld [vmem:[#allocation2 + $0x240] sm:$0xff]
    %v112 = vld [vmem:[#allocation2 + $0x248] sm:$0xff]
    %v113 = vld [vmem:[#allocation2 + $0x250] sm:$0xff]
    %v114 = vld [vmem:[#allocation2 + $0x258] sm:$0xff]
    %v115 = vld [vmem:[#allocation2 + $0x260] sm:$0xff]
    %v116 = vld [vmem:[#allocation2 + $0x268] sm:$0xff]
    %v117 = vld [vmem:[#allocation2 + $0x270] sm:$0xff]
    %v118 = vld [vmem:[#allocation2 + $0x278] sm:$0xff]
    %v119 = vld [vmem:[#allocation2 + $0x280] sm:$0xff]
    %v120 = vld [vmem:[#allocation2 + $0x288] sm:$0xff]
    %v121 = vld [vmem:[#allocation2 + $0x290] sm:$0xff]
    %v122 = vld [vmem:[#allocation2 + $0x298] sm:$0xff]
    %v123 = vld [vmem:[#allocation2 + $0x2a0] sm:$0xff]
    %v124 = vld [vmem:[#allocation2 + $0x2a8] sm:$0xff]
    %v125 = vld [vmem:[#allocation2 + $0x2b0] sm:$0xff]
    %v126 = vld [vmem:[#allocation2 + $0x2b8] sm:$0xff]
    %v127 = vld [vmem:[#allocation2 + $0x2c0] sm:$0xff]
    %v128 = vld [vmem:[#allocation2 + $0x2c8] sm:$0xff]
    %v129 = vld [vmem:[#allocation2 + $0x2d0] sm:$0xff]
    %v130 = vld [vmem:[#allocation2 + $0x2d8] sm:$0xff]
    %v131 = vld [vmem:[#allocation2 + $0x2e0] sm:$0xff]
    %v132 = vld [vmem:[#allocation2 + $0x2e8] sm:$0xff]
    %v133 = vld [vmem:[#allocation2 + $0x2f0] sm:$0xff]
    %v134 = vld [vmem:[#allocation2 + $0x2f8] sm:$0xff]
    %v135 = vld [vmem:[%s4] sm:$0x3]
    %v136 = vld [vmem:[%s0] sm:$0xff]
    %138 = vset.pattern.permute.xlu0 0
    %139 = vperm.xlu0 %138, %v136
    %v140 = vpop.permute.xlu0 %139
    %v144 = vlaneseq
    %v145 = vshrl.u32 %v144, 7
    %v146 = vsub.s32 0, %v145
    %v147 = vrot.slane %v36, %v146
    %v148 = vlaneseq
    %v149 = vshrl.u32 %v148, 7
    %v150 = vsub.s32 2, %v149
    %v151 = vrot.slane %v36, %v150
    %v152 = vlaneseq
    %v153 = vshrl.u32 %v152, 7
    %v154 = vsub.s32 4, %v153
    %v155 = vrot.slane %v36, %v154
    %v156 = vlaneseq
    %v157 = vshrl.u32 %v156, 7
    %v158 = vsub.s32 6, %v157
    %v159 = vrot.slane %v36, %v158
    %v160 = vlaneseq
    %v161 = vshrl.u32 %v160, 7
    %v162 = vsub.s32 0, %v161
    %v163 = vrot.slane %v37, %v162
    %v164 = vlaneseq
    %v165 = vshrl.u32 %v164, 7
    %v166 = vsub.s32 2, %v165
    %v167 = vrot.slane %v37, %v166
    %v174 = vlaneseq
    %v175 = vshrl.u32 %v174, 7
    %v176 = vsub.s32 0, %v175
    %v177 = vrot.slane %v147, %v176
    %v178 = vlaneseq
    %v179 = vshrl.u32 %v178, 7
    %v180 = vsub.s32 0, %v179
    %v181 = vrot.slane %v151, %v180
    %v182 = vlaneseq
    %v183 = vshrl.u32 %v182, 7
    %v184 = vsub.s32 0, %v183
    %v185 = vrot.slane %v155, %v184
    %v186 = vlaneseq
    %v187 = vshrl.u32 %v186, 7
    %v188 = vsub.s32 0, %v187
    %v189 = vrot.slane %v159, %v188
    %v190 = vlaneseq
    %v191 = vshrl.u32 %v190, 7
    %v192 = vsub.s32 0, %v191
    %v193 = vrot.slane %v163, %v192
    %v194 = vlaneseq
    %v195 = vshrl.u32 %v194, 7
    %v196 = vsub.s32 0, %v195
    %v197 = vrot.slane %v167, %v196
    %v198 = vmul.f32 %v140, %v177
    %v199 = vmul.f32 %v140, %v181
    %v200 = vmul.f32 %v140, %v185
    %v201 = vmul.f32 %v140, %v189
    %v202 = vmul.f32 %v140, %v193
    %v203 = vmul.f32 %v140, %v197
    %204 = vset.pattern.permute.xlu0 1
    %205 = vperm.xlu0 %204, %v136
    %v206 = vpop.permute.xlu0 %205
    %v208 = vlaneseq
    %v209 = vshrl.u32 %v208, 7
    %v210 = vsub.s32 1, %v209
    %v211 = vrot.slane %v36, %v210
    %v212 = vlaneseq
    %v213 = vshrl.u32 %v212, 7
    %v214 = vsub.s32 3, %v213
    %v215 = vrot.slane %v36, %v214
    %v216 = vlaneseq
    %v217 = vshrl.u32 %v216, 7
    %v218 = vsub.s32 5, %v217
    %v219 = vrot.slane %v36, %v218
    %v220 = vlaneseq
    %v221 = vshrl.u32 %v220, 7
    %v222 = vsub.s32 7, %v221
    %v223 = vrot.slane %v36, %v222
    %v224 = vlaneseq
    %v225 = vshrl.u32 %v224, 7
    %v226 = vsub.s32 1, %v225
    %v227 = vrot.slane %v37, %v226
    %v228 = vlaneseq
    %v229 = vshrl.u32 %v228, 7
    %v230 = vsub.s32 3, %v229
    %v231 = vrot.slane %v37, %v230
    %v238 = vlaneseq
    %v239 = vshrl.u32 %v238, 7
    %v240 = vsub.s32 1, %v239
    %v241 = vrot.slane %v211, %v240
    %v242 = vlaneseq
    %v243 = vshrl.u32 %v242, 7
    %v244 = vsub.s32 1, %v243
    %v245 = vrot.slane %v215, %v244
    %v246 = vlaneseq
    %v247 = vshrl.u32 %v246, 7
    %v248 = vsub.s32 1, %v247
    %v249 = vrot.slane %v219, %v248
    %v250 = vlaneseq
    %v251 = vshrl.u32 %v250, 7
    %v252 = vsub.s32 1, %v251
    %v253 = vrot.slane %v223, %v252
    %v254 = vlaneseq
    %v255 = vshrl.u32 %v254, 7
    %v256 = vsub.s32 1, %v255
    %v257 = vrot.slane %v227, %v256
    %v258 = vlaneseq
    %v259 = vshrl.u32 %v258, 7
    %v260 = vsub.s32 1, %v259
    %v261 = vrot.slane %v231, %v260
    %v262 = vmul.f32 %v206, %v241
    %v263 = vmul.f32 %v206, %v245
    %v264 = vmul.f32 %v206, %v249
    %v265 = vmul.f32 %v206, %v253
    %v266 = vmul.f32 %v206, %v257
    %v267 = vmul.f32 %v206, %v261
    %v268 = vadd.f32 %v198, %v262
    %v269 = vadd.f32 %v199, %v263
    %v270 = vadd.f32 %v200, %v264
    %v271 = vadd.f32 %v201, %v265
    %v272 = vadd.f32 %v202, %v266
    %v273 = vadd.f32 %v203, %v267
    %v275 = vlaneseq
    %v276 = vshrl.u32 %v275, 7
    %v277 = vsub.s32 0, %v276
    %v278 = vrot.slane %v38, %v277
    %v279 = vlaneseq
    %v280 = vshrl.u32 %v279, 7
    %v281 = vsub.s32 1, %v280
    %v282 = vrot.slane %v38, %v281
    %v283 = vlaneseq
    %v284 = vshrl.u32 %v283, 7
    %v285 = vsub.s32 2, %v284
    %v286 = vrot.slane %v38, %v285
    %v287 = vlaneseq
    %v288 = vshrl.u32 %v287, 7
    %v289 = vsub.s32 3, %v288
    %v290 = vrot.slane %v38, %v289
    %v291 = vlaneseq
    %v292 = vshrl.u32 %v291, 7
    %v293 = vsub.s32 4, %v292
    %v294 = vrot.slane %v38, %v293
    %v295 = vlaneseq
    %v296 = vshrl.u32 %v295, 7
    %v297 = vsub.s32 5, %v296
    %v298 = vrot.slane %v38, %v297
    %v305 = vadd.f32 %v268, %v278
    %v306 = vadd.f32 %v269, %v282
    %v307 = vadd.f32 %v270, %v286
    %v308 = vadd.f32 %v271, %v290
    %v309 = vadd.f32 %v272, %v294
    %v310 = vadd.f32 %v273, %v298
    %v407 = vunpack.c.l.b16 %v39
    %v408 = vunpack.c.h.b16 %v39
    %v409 = vunpack.c.l.b16 %v40
    %v410 = vunpack.c.h.b16 %v40
    %v411 = vunpack.c.l.b16 %v41
    %v412 = vunpack.c.h.b16 %v41
    %v413 = vunpack.c.l.b16 %v42
    %v414 = vunpack.c.h.b16 %v42
    %v415 = vunpack.c.l.b16 %v43
    %v416 = vunpack.c.h.b16 %v43
    %v417 = vunpack.c.l.b16 %v44
    %v418 = vunpack.c.h.b16 %v44
    %v419 = vunpack.c.l.b16 %v45
    %v420 = vunpack.c.h.b16 %v45
    %v421 = vunpack.c.l.b16 %v46
    %v422 = vunpack.c.h.b16 %v46
    %v423 = vunpack.c.l.b16 %v47
    %v424 = vunpack.c.h.b16 %v47
    %v425 = vunpack.c.l.b16 %v48
    %v426 = vunpack.c.h.b16 %v48
    %v427 = vunpack.c.l.b16 %v49
    %v428 = vunpack.c.h.b16 %v49
    %v429 = vunpack.c.l.b16 %v50
    %v430 = vunpack.c.h.b16 %v50
    %v431 = vunpack.c.l.b16 %v51
    %v432 = vunpack.c.h.b16 %v51
    %v433 = vunpack.c.l.b16 %v52
    %v434 = vunpack.c.h.b16 %v52
    %v435 = vunpack.c.l.b16 %v53
    %v436 = vunpack.c.h.b16 %v53
    %v437 = vunpack.c.l.b16 %v54
    %v438 = vunpack.c.h.b16 %v54
    %v439 = vunpack.c.l.b16 %v55
    %v440 = vunpack.c.h.b16 %v55
    %v441 = vunpack.c.l.b16 %v56
    %v442 = vunpack.c.h.b16 %v56
    %v443 = vunpack.c.l.b16 %v57
    %v444 = vunpack.c.h.b16 %v57
    %v445 = vunpack.c.l.b16 %v58
    %v446 = vunpack.c.h.b16 %v58
    %v447 = vunpack.c.l.b16 %v59
    %v448 = vunpack.c.h.b16 %v59
    %v449 = vunpack.c.l.b16 %v60
    %v450 = vunpack.c.h.b16 %v60
    %v451 = vunpack.c.l.b16 %v61
    %v452 = vunpack.c.h.b16 %v61
    %v453 = vunpack.c.l.b16 %v62
    %v454 = vunpack.c.h.b16 %v62
    %v455 = vunpack.c.l.b16 %v63
    %v456 = vunpack.c.h.b16 %v63
    %v457 = vunpack.c.l.b16 %v64
    %v458 = vunpack.c.h.b16 %v64
    %v459 = vunpack.c.l.b16 %v65
    %v460 = vunpack.c.h.b16 %v65
    %v461 = vunpack.c.l.b16 %v66
    %v462 = vunpack.c.h.b16 %v66
    %v463 = vunpack.c.l.b16 %v67
    %v464 = vunpack.c.h.b16 %v67
    %v465 = vunpack.c.l.b16 %v68
    %v466 = vunpack.c.h.b16 %v68
    %v467 = vunpack.c.l.b16 %v69
    %v468 = vunpack.c.h.b16 %v69
    %v469 = vunpack.c.l.b16 %v70
    %v470 = vunpack.c.h.b16 %v70
    %v471 = vunpack.c.l.b16 %v71
    %v472 = vunpack.c.h.b16 %v71
    %v473 = vunpack.c.l.b16 %v72
    %v474 = vunpack.c.h.b16 %v72
    %v475 = vunpack.c.l.b16 %v73
    %v476 = vunpack.c.h.b16 %v73
    %v477 = vunpack.c.l.b16 %v74
    %v478 = vunpack.c.h.b16 %v74
    %v479 = vunpack.c.l.b16 %v75
    %v480 = vunpack.c.h.b16 %v75
    %v481 = vunpack.c.l.b16 %v76
    %v482 = vunpack.c.h.b16 %v76
    %v483 = vunpack.c.l.b16 %v77
    %v484 = vunpack.c.h.b16 %v77
    %v485 = vunpack.c.l.b16 %v78
    %v486 = vunpack.c.h.b16 %v78
    %v487 = vunpack.c.l.b16 %v79
    %v488 = vunpack.c.h.b16 %v79
    %v489 = vunpack.c.l.b16 %v80
    %v490 = vunpack.c.h.b16 %v80
    %v491 = vunpack.c.l.b16 %v81
    %v492 = vunpack.c.h.b16 %v81
    %v493 = vunpack.c.l.b16 %v82
    %v494 = vunpack.c.h.b16 %v82
    %v495 = vunpack.c.l.b16 %v83
    %v496 = vunpack.c.h.b16 %v83
    %v497 = vunpack.c.l.b16 %v84
    %v498 = vunpack.c.h.b16 %v84
    %v499 = vunpack.c.l.b16 %v85
    %v500 = vunpack.c.h.b16 %v85
    %v501 = vunpack.c.l.b16 %v86
    %v502 = vunpack.c.h.b16 %v86
    %v503 = vunpack.c.l.b16 %v87
    %v504 = vunpack.c.h.b16 %v87
    %v505 = vunpack.c.l.b16 %v88
    %v506 = vunpack.c.h.b16 %v88
    %v507 = vunpack.c.l.b16 %v89
    %v508 = vunpack.c.h.b16 %v89
    %v509 = vunpack.c.l.b16 %v90
    %v510 = vunpack.c.h.b16 %v90
    %v511 = vunpack.c.l.b16 %v91
    %v512 = vunpack.c.h.b16 %v91
    %v513 = vunpack.c.l.b16 %v92
    %v514 = vunpack.c.h.b16 %v92
    %v515 = vunpack.c.l.b16 %v93
    %v516 = vunpack.c.h.b16 %v93
    %v517 = vunpack.c.l.b16 %v94
    %v518 = vunpack.c.h.b16 %v94
    %v519 = vunpack.c.l.b16 %v95
    %v520 = vunpack.c.h.b16 %v95
    %v521 = vunpack.c.l.b16 %v96
    %v522 = vunpack.c.h.b16 %v96
    %v523 = vunpack.c.l.b16 %v97
    %v524 = vunpack.c.h.b16 %v97
    %v525 = vunpack.c.l.b16 %v98
    %v526 = vunpack.c.h.b16 %v98
    %v527 = vunpack.c.l.b16 %v99
    %v528 = vunpack.c.h.b16 %v99
    %v529 = vunpack.c.l.b16 %v100
    %v530 = vunpack.c.h.b16 %v100
    %v531 = vunpack.c.l.b16 %v101
    %v532 = vunpack.c.h.b16 %v101
    %v533 = vunpack.c.l.b16 %v102
    %v534 = vunpack.c.h.b16 %v102
    %v535 = vunpack.c.l.b16 %v103
    %v536 = vunpack.c.h.b16 %v103
    %v537 = vunpack.c.l.b16 %v104
    %v538 = vunpack.c.h.b16 %v104
    %v539 = vunpack.c.l.b16 %v105
    %v540 = vunpack.c.h.b16 %v105
    %v541 = vunpack.c.l.b16 %v106
    %v542 = vunpack.c.h.b16 %v106
    %v543 = vunpack.c.l.b16 %v107
    %v544 = vunpack.c.h.b16 %v107
    %v545 = vunpack.c.l.b16 %v108
    %v546 = vunpack.c.h.b16 %v108
    %v547 = vunpack.c.l.b16 %v109
    %v548 = vunpack.c.h.b16 %v109
    %v549 = vunpack.c.l.b16 %v110
    %v550 = vunpack.c.h.b16 %v110
    %v551 = vunpack.c.l.b16 %v111
    %v552 = vunpack.c.h.b16 %v111
    %v553 = vunpack.c.l.b16 %v112
    %v554 = vunpack.c.h.b16 %v112
    %v555 = vunpack.c.l.b16 %v113
    %v556 = vunpack.c.h.b16 %v113
    %v557 = vunpack.c.l.b16 %v114
    %v558 = vunpack.c.h.b16 %v114
    %v559 = vunpack.c.l.b16 %v115
    %v560 = vunpack.c.h.b16 %v115
    %v561 = vunpack.c.l.b16 %v116
    %v562 = vunpack.c.h.b16 %v116
    %v563 = vunpack.c.l.b16 %v117
    %v564 = vunpack.c.h.b16 %v117
    %v565 = vunpack.c.l.b16 %v118
    %v566 = vunpack.c.h.b16 %v118
    %v567 = vunpack.c.l.b16 %v119
    %v568 = vunpack.c.h.b16 %v119
    %v569 = vunpack.c.l.b16 %v120
    %v570 = vunpack.c.h.b16 %v120
    %v571 = vunpack.c.l.b16 %v121
    %v572 = vunpack.c.h.b16 %v121
    %v573 = vunpack.c.l.b16 %v122
    %v574 = vunpack.c.h.b16 %v122
    %v575 = vunpack.c.l.b16 %v123
    %v576 = vunpack.c.h.b16 %v123
    %v577 = vunpack.c.l.b16 %v124
    %v578 = vunpack.c.h.b16 %v124
    %v579 = vunpack.c.l.b16 %v125
    %v580 = vunpack.c.h.b16 %v125
    %v581 = vunpack.c.l.b16 %v126
    %v582 = vunpack.c.h.b16 %v126
    %v583 = vunpack.c.l.b16 %v127
    %v584 = vunpack.c.h.b16 %v127
    %v585 = vunpack.c.l.b16 %v128
    %v586 = vunpack.c.h.b16 %v128
    %v587 = vunpack.c.l.b16 %v129
    %v588 = vunpack.c.h.b16 %v129
    %v589 = vunpack.c.l.b16 %v130
    %v590 = vunpack.c.h.b16 %v130
    %v591 = vunpack.c.l.b16 %v131
    %v592 = vunpack.c.h.b16 %v131
    %v593 = vunpack.c.l.b16 %v132
    %v594 = vunpack.c.h.b16 %v132
    %v595 = vunpack.c.l.b16 %v133
    %v596 = vunpack.c.h.b16 %v133
    %v597 = vunpack.c.l.b16 %v134
    %v598 = vunpack.c.h.b16 %v134
    %v599 = vpack.c.b16 %v413, %v407
    %v600 = vpack.c.b16 %v414, %v408
    %v601 = vpack.c.b16 %v415, %v409
    %v602 = vpack.c.b16 %v416, %v410
    %v603 = vpack.c.b16 %v417, %v411
    %v604 = vpack.c.b16 %v418, %v412
    %v605 = vpack.c.b16 %v425, %v419
    %v606 = vpack.c.b16 %v426, %v420
    %v607 = vpack.c.b16 %v427, %v421
    %v608 = vpack.c.b16 %v428, %v422
    %v609 = vpack.c.b16 %v429, %v423
    %v610 = vpack.c.b16 %v430, %v424
    %v611 = vpack.c.b16 %v437, %v431
    %v612 = vpack.c.b16 %v438, %v432
    %v613 = vpack.c.b16 %v439, %v433
    %v614 = vpack.c.b16 %v440, %v434
    %v615 = vpack.c.b16 %v441, %v435
    %v616 = vpack.c.b16 %v442, %v436
    %v617 = vpack.c.b16 %v449, %v443
    %v618 = vpack.c.b16 %v450, %v444
    %v619 = vpack.c.b16 %v451, %v445
    %v620 = vpack.c.b16 %v452, %v446
    %v621 = vpack.c.b16 %v453, %v447
    %v622 = vpack.c.b16 %v454, %v448
    %v623 = vpack.c.b16 %v461, %v455
    %v624 = vpack.c.b16 %v462, %v456
    %v625 = vpack.c.b16 %v463, %v457
    %v626 = vpack.c.b16 %v464, %v458
    %v627 = vpack.c.b16 %v465, %v459
    %v628 = vpack.c.b16 %v466, %v460
    %v629 = vpack.c.b16 %v473, %v467
    %v630 = vpack.c.b16 %v474, %v468
    %v631 = vpack.c.b16 %v475, %v469
    %v632 = vpack.c.b16 %v476, %v470
    %v633 = vpack.c.b16 %v477, %v471
    %v634 = vpack.c.b16 %v478, %v472
    %v635 = vpack.c.b16 %v485, %v479
    %v636 = vpack.c.b16 %v486, %v480
    %v637 = vpack.c.b16 %v487, %v481
    %v638 = vpack.c.b16 %v488, %v482
    %v639 = vpack.c.b16 %v489, %v483
    %v640 = vpack.c.b16 %v490, %v484
    %v641 = vpack.c.b16 %v497, %v491
    %v642 = vpack.c.b16 %v498, %v492
    %v643 = vpack.c.b16 %v499, %v493
    %v644 = vpack.c.b16 %v500, %v494
    %v645 = vpack.c.b16 %v501, %v495
    %v646 = vpack.c.b16 %v502, %v496
    %v647 = vpack.c.b16 %v509, %v503
    %v648 = vpack.c.b16 %v510, %v504
    %v649 = vpack.c.b16 %v511, %v505
    %v650 = vpack.c.b16 %v512, %v506
    %v651 = vpack.c.b16 %v513, %v507
    %v652 = vpack.c.b16 %v514, %v508
    %v653 = vpack.c.b16 %v521, %v515
    %v654 = vpack.c.b16 %v522, %v516
    %v655 = vpack.c.b16 %v523, %v517
    %v656 = vpack.c.b16 %v524, %v518
    %v657 = vpack.c.b16 %v525, %v519
    %v658 = vpack.c.b16 %v526, %v520
    %v659 = vpack.c.b16 %v533, %v527
    %v660 = vpack.c.b16 %v534, %v528
    %v661 = vpack.c.b16 %v535, %v529
    %v662 = vpack.c.b16 %v536, %v530
    %v663 = vpack.c.b16 %v537, %v531
    %v664 = vpack.c.b16 %v538, %v532
    %v665 = vpack.c.b16 %v545, %v539
    %v666 = vpack.c.b16 %v546, %v540
    %v667 = vpack.c.b16 %v547, %v541
    %v668 = vpack.c.b16 %v548, %v542
    %v669 = vpack.c.b16 %v549, %v543
    %v670 = vpack.c.b16 %v550, %v544
    %v671 = vpack.c.b16 %v557, %v551
    %v672 = vpack.c.b16 %v558, %v552
    %v673 = vpack.c.b16 %v559, %v553
    %v674 = vpack.c.b16 %v560, %v554
    %v675 = vpack.c.b16 %v561, %v555
    %v676 = vpack.c.b16 %v562, %v556
    %v677 = vpack.c.b16 %v569, %v563
    %v678 = vpack.c.b16 %v570, %v564
    %v679 = vpack.c.b16 %v571, %v565
    %v680 = vpack.c.b16 %v572, %v566
    %v681 = vpack.c.b16 %v573, %v567
    %v682 = vpack.c.b16 %v574, %v568
    %v683 = vpack.c.b16 %v581, %v575
    %v684 = vpack.c.b16 %v582, %v576
    %v685 = vpack.c.b16 %v583, %v577
    %v686 = vpack.c.b16 %v584, %v578
    %v687 = vpack.c.b16 %v585, %v579
    %v688 = vpack.c.b16 %v586, %v580
    %v689 = vpack.c.b16 %v593, %v587
    %v690 = vpack.c.b16 %v594, %v588
    %v691 = vpack.c.b16 %v595, %v589
    %v692 = vpack.c.b16 %v596, %v590
    %v693 = vpack.c.b16 %v597, %v591
    %v694 = vpack.c.b16 %v598, %v592
    %791 = vmatprep.subr.bf16.mxu0 %v642
    %792 = vmatpush1.bf16.msra.mxu0 %v641
    %793 = vmatprep.subr.bf16.mxu0 %v636
    %794 = vmatpush1.bf16.msra.mxu0 %v635
    %795 = vmatprep.subr.bf16.mxu0 %v630
    %796 = vmatpush1.bf16.msra.mxu0 %v629
    %797 = vmatprep.subr.bf16.mxu0 %v624
    %798 = vmatpush1.bf16.msra.mxu0 %v623
    %799 = vmatprep.subr.bf16.mxu0 %v618
    %800 = vmatpush1.bf16.msra.mxu0 %v617
    %801 = vmatprep.subr.bf16.mxu0 %v612
    %802 = vmatpush1.bf16.msra.mxu0 %v611
    %803 = vmatprep.subr.bf16.mxu0 %v606
    %804 = vmatpush1.bf16.msra.mxu0 %v605
    %805 = vmatprep.subr.bf16.mxu0 %v600
    %806 = vmatpush1.bf16.msra.mxu0 %v599
    %807 = vmatprep.subr.bf16.mxu0 %v690
    %808 = vmatpush2.bf16.msra.mxu0 %v689
    %809 = vmatprep.subr.bf16.mxu0 %v684
    %810 = vmatpush2.bf16.msra.mxu0 %v683
    %811 = vmatprep.subr.bf16.mxu0 %v678
    %812 = vmatpush2.bf16.msra.mxu0 %v677
    %813 = vmatprep.subr.bf16.mxu0 %v672
    %814 = vmatpush2.bf16.msra.mxu0 %v671
    %815 = vmatprep.subr.bf16.mxu0 %v666
    %816 = vmatpush2.bf16.msra.mxu0 %v665
    %817 = vmatprep.subr.bf16.mxu0 %v660
    %818 = vmatpush2.bf16.msra.mxu0 %v659
    %819 = vmatprep.subr.bf16.mxu0 %v654
    %820 = vmatpush2.bf16.msra.mxu0 %v653
    %821 = vmatprep.subr.bf16.mxu0 %v648
    %822 = vmatpush2.bf16.msra.mxu0 %v647
    %823 = vmatprep.mubr.bf16.mxu0 0
    %824 = vmatmul.mubr.bf16.gmra.mxu0 0
    %v825 = vpop.f32.mrf.mxu0
    %v826 = vadd.f32 0.0, %v825
    %v827 = vpop.f32.mrf.mxu0
    %v828 = vadd.f32 0.0, %v827
    %v829 = vpop.f32.mrf.mxu0
    %v830 = vpop.f32.mrf.mxu0
    %831 = vdwg.mxu0
    %832 = vmatprep.subr.bf16.mxu0 %v644
    %833 = vmatpush1.bf16.msra.mxu0 %v643
    %834 = vmatprep.subr.bf16.mxu0 %v638
    %835 = vmatpush1.bf16.msra.mxu0 %v637
    %836 = vmatprep.subr.bf16.mxu0 %v632
    %837 = vmatpush1.bf16.msra.mxu0 %v631
    %838 = vmatprep.subr.bf16.mxu0 %v626
    %839 = vmatpush1.bf16.msra.mxu0 %v625
    %840 = vmatprep.subr.bf16.mxu0 %v620
    %841 = vmatpush1.bf16.msra.mxu0 %v619
    %842 = vmatprep.subr.bf16.mxu0 %v614
    %843 = vmatpush1.bf16.msra.mxu0 %v613
    %844 = vmatprep.subr.bf16.mxu0 %v608
    %845 = vmatpush1.bf16.msra.mxu0 %v607
    %846 = vmatprep.subr.bf16.mxu0 %v602
    %847 = vmatpush1.bf16.msra.mxu0 %v601
    %848 = vmatprep.subr.bf16.mxu0 %v692
    %849 = vmatpush2.bf16.msra.mxu0 %v691
    %850 = vmatprep.subr.bf16.mxu0 %v686
    %851 = vmatpush2.bf16.msra.mxu0 %v685
    %852 = vmatprep.subr.bf16.mxu0 %v680
    %853 = vmatpush2.bf16.msra.mxu0 %v679
    %854 = vmatprep.subr.bf16.mxu0 %v674
    %855 = vmatpush2.bf16.msra.mxu0 %v673
    %856 = vmatprep.subr.bf16.mxu0 %v668
    %857 = vmatpush2.bf16.msra.mxu0 %v667
    %858 = vmatprep.subr.bf16.mxu0 %v662
    %859 = vmatpush2.bf16.msra.mxu0 %v661
    %860 = vmatprep.subr.bf16.mxu0 %v656
    %861 = vmatpush2.bf16.msra.mxu0 %v655
    %862 = vmatprep.subr.bf16.mxu0 %v650
    %863 = vmatpush2.bf16.msra.mxu0 %v649
    %864 = vmatprep.mubr.bf16.mxu0 0
    %865 = vmatmul.mubr.bf16.gmra.mxu0 0
    %v866 = vpop.f32.mrf.mxu0
    %v867 = vadd.f32 0.0, %v866
    %v868 = vpop.f32.mrf.mxu0
    %v869 = vadd.f32 0.0, %v868
    %v870 = vpop.f32.mrf.mxu0
    %v871 = vpop.f32.mrf.mxu0
    %872 = vdwg.mxu0
    %873 = vmatprep.subr.bf16.mxu0 %v646
    %874 = vmatpush1.bf16.msra.mxu0 %v645
    %875 = vmatprep.subr.bf16.mxu0 %v640
    %876 = vmatpush1.bf16.msra.mxu0 %v639
    %877 = vmatprep.subr.bf16.mxu0 %v634
    %878 = vmatpush1.bf16.msra.mxu0 %v633
    %879 = vmatprep.subr.bf16.mxu0 %v628
    %880 = vmatpush1.bf16.msra.mxu0 %v627
    %881 = vmatprep.subr.bf16.mxu0 %v622
    %882 = vmatpush1.bf16.msra.mxu0 %v621
    %883 = vmatprep.subr.bf16.mxu0 %v616
    %884 = vmatpush1.bf16.msra.mxu0 %v615
    %885 = vmatprep.subr.bf16.mxu0 %v610
    %886 = vmatpush1.bf16.msra.mxu0 %v609
    %887 = vmatprep.subr.bf16.mxu0 %v604
    %888 = vmatpush1.bf16.msra.mxu0 %v603
    %889 = vmatprep.subr.bf16.mxu0 %v694
    %890 = vmatpush2.bf16.msra.mxu0 %v693
    %891 = vmatprep.subr.bf16.mxu0 %v688
    %892 = vmatpush2.bf16.msra.mxu0 %v687
    %893 = vmatprep.subr.bf16.mxu0 %v682
    %894 = vmatpush2.bf16.msra.mxu0 %v681
    %895 = vmatprep.subr.bf16.mxu0 %v676
    %896 = vmatpush2.bf16.msra.mxu0 %v675
    %897 = vmatprep.subr.bf16.mxu0 %v670
    %898 = vmatpush2.bf16.msra.mxu0 %v669
    %899 = vmatprep.subr.bf16.mxu0 %v664
    %900 = vmatpush2.bf16.msra.mxu0 %v663
    %901 = vmatprep.subr.bf16.mxu0 %v658
    %902 = vmatpush2.bf16.msra.mxu0 %v657
    %903 = vmatprep.subr.bf16.mxu0 %v652
    %904 = vmatpush2.bf16.msra.mxu0 %v651
    %905 = vmatprep.mubr.bf16.mxu0 0
    %906 = vmatmul.mubr.bf16.gmra.mxu0 0
    %v907 = vpop.f32.mrf.mxu0
    %v908 = vadd.f32 0.0, %v907
    %v909 = vpop.f32.mrf.mxu0
    %v910 = vadd.f32 0.0, %v909
    %v911 = vpop.f32.mrf.mxu0
    %v912 = vpop.f32.mrf.mxu0
    %913 = vdwg.mxu0
    %v914 = vadd.f32 %v305, %v826
    %v915 = vadd.f32 %v306, %v828
    %v916 = vmul.f32 %v914, 0.5
    %v917 = vmul.f32 %v915, 0.5
    %v918 = vtanh.pop %v916
    %v919 = vtanh.pop %v917
    %v920 = vmul.f32 %v918, 0.5
    %v921 = vmul.f32 %v919, 0.5
    %v922 = vadd.f32 %v920, 0.5
    %v923 = vadd.f32 %v921, 0.5
    %v924 = vadd.f32 %v307, %v867
    %v925 = vadd.f32 %v308, %v869
    %v926 = vmul.f32 %v924, 0.5
    %v927 = vmul.f32 %v925, 0.5
    %v928 = vtanh.pop %v926
    %v929 = vtanh.pop %v927
    %v930 = vmul.f32 %v928, 0.5
    %v931 = vmul.f32 %v929, 0.5
    %v932 = vadd.f32 %v930, 0.5
    %v933 = vadd.f32 %v931, 0.5
    %v935 = vlaneseq
    %v936 = vshrl.u32 %v935, 7
    %v937 = vsub.s32 0, %v936
    %v938 = vrot.slane %v135, %v937
    %v939 = vlaneseq
    %v940 = vshrl.u32 %v939, 7
    %v941 = vsub.s32 1, %v940
    %v942 = vrot.slane %v135, %v941
    %v945 = vadd.f32 %v908, %v938
    %v946 = vadd.f32 %v910, %v942
    %v947 = vmul.f32 %v922, %v945
    %v948 = vmul.f32 %v923, %v946
    %v949 = vadd.f32 %v309, %v947
    %v950 = vadd.f32 %v310, %v948
    %v951 = vtanh.pop %v949
    %v952 = vtanh.pop %v950
    %v953 = vsub.f32 1.0, %v932
    %v954 = vsub.f32 1.0, %v933
    %v955 = vmul.f32 %v953, %v951
    %v956 = vmul.f32 %v954, %v952
    %v957 = vmul.f32 %v932, 0.0
    %v958 = vmul.f32 %v933, 0.0
    %v959 = vadd.f32 %v955, %v957
    %v960 = vadd.f32 %v956, %v958
    %s961 = scalar_lea.vmem %s0, 8
    %v962 = vld [vmem:[%s961] sm:$0xff]
    %964 = vset.pattern.permute.xlu0 0
    %965 = vperm.xlu0 %964, %v962
    %v966 = vpop.permute.xlu0 %965
    %v968 = vmul.f32 %v966, %v177
    %v969 = vmul.f32 %v966, %v181
    %v970 = vmul.f32 %v966, %v185
    %v971 = vmul.f32 %v966, %v189
    %v972 = vmul.f32 %v966, %v193
    %v973 = vmul.f32 %v966, %v197
    %974 = vset.pattern.permute.xlu0 1
    %975 = vperm.xlu0 %974, %v962
    %v976 = vpop.permute.xlu0 %975
    %v978 = vmul.f32 %v976, %v241
    %v979 = vmul.f32 %v976, %v245
    %v980 = vmul.f32 %v976, %v249
    %v981 = vmul.f32 %v976, %v253
    %v982 = vmul.f32 %v976, %v257
    %v983 = vmul.f32 %v976, %v261
    %v984 = vadd.f32 %v968, %v978
    %v985 = vadd.f32 %v969, %v979
    %v986 = vadd.f32 %v970, %v980
    %v987 = vadd.f32 %v971, %v981
    %v988 = vadd.f32 %v972, %v982
    %v989 = vadd.f32 %v973, %v983
    %v990 = vadd.f32 %v984, %v278
    %v991 = vadd.f32 %v985, %v282
    %v992 = vadd.f32 %v986, %v286
    %v993 = vadd.f32 %v987, %v290
    %v994 = vadd.f32 %v988, %v294
    %v995 = vadd.f32 %v989, %v298
    %v996 = vpack.c.bf16 %v959, %v959
    %v997 = vpack.c.bf16 %v960, %v960
    %998 = vmatprep.subr.bf16.mxu0 %v642
    %999 = vmatpush1.bf16.msra.mxu0 %v641
    %1000 = vmatprep.subr.bf16.mxu0 %v636
    %1001 = vmatpush1.bf16.msra.mxu0 %v635
    %1002 = vmatprep.subr.bf16.mxu0 %v630
    %1003 = vmatpush1.bf16.msra.mxu0 %v629
    %1004 = vmatprep.subr.bf16.mxu0 %v624
    %1005 = vmatpush1.bf16.msra.mxu0 %v623
    %1006 = vmatprep.subr.bf16.mxu0 %v618
    %1007 = vmatpush1.bf16.msra.mxu0 %v617
    %1008 = vmatprep.subr.bf16.mxu0 %v612
    %1009 = vmatpush1.bf16.msra.mxu0 %v611
    %1010 = vmatprep.subr.bf16.mxu0 %v606
    %1011 = vmatpush1.bf16.msra.mxu0 %v605
    %1012 = vmatprep.subr.bf16.mxu0 %v600
    %1013 = vmatpush1.bf16.msra.mxu0 %v599
    %1014 = vmatprep.subr.bf16.mxu0 %v690
    %1015 = vmatpush2.bf16.msra.mxu0 %v689
    %1016 = vmatprep.subr.bf16.mxu0 %v684
    %1017 = vmatpush2.bf16.msra.mxu0 %v683
    %1018 = vmatprep.subr.bf16.mxu0 %v678
    %1019 = vmatpush2.bf16.msra.mxu0 %v677
    %1020 = vmatprep.subr.bf16.mxu0 %v672
    %1021 = vmatpush2.bf16.msra.mxu0 %v671
    %1022 = vmatprep.subr.bf16.mxu0 %v666
    %1023 = vmatpush2.bf16.msra.mxu0 %v665
    %1024 = vmatprep.subr.bf16.mxu0 %v660
    %1025 = vmatpush2.bf16.msra.mxu0 %v659
    %1026 = vmatprep.subr.bf16.mxu0 %v654
    %1027 = vmatpush2.bf16.msra.mxu0 %v653
    %1028 = vmatprep.subr.bf16.mxu0 %v648
    %1029 = vmatpush2.bf16.msra.mxu0 %v647
    %1030 = vmatprep.mubr.bf16.mxu0 %v997
    %1031 = vmatmul.mubr.bf16.gmra.mxu0 %v996
    %v1032 = vpop.f32.mrf.mxu0
    %v1033 = vadd.f32 0.0, %v1032
    %v1034 = vpop.f32.mrf.mxu0
    %v1035 = vadd.f32 0.0, %v1034
    %v1036 = vpop.f32.mrf.mxu0
    %v1037 = vpop.f32.mrf.mxu0
    %1038 = vdwg.mxu0
    %1039 = vmatprep.subr.bf16.mxu0 %v644
    %1040 = vmatpush1.bf16.msra.mxu0 %v643
    %1041 = vmatprep.subr.bf16.mxu0 %v638
    %1042 = vmatpush1.bf16.msra.mxu0 %v637
    %1043 = vmatprep.subr.bf16.mxu0 %v632
    %1044 = vmatpush1.bf16.msra.mxu0 %v631
    %1045 = vmatprep.subr.bf16.mxu0 %v626
    %1046 = vmatpush1.bf16.msra.mxu0 %v625
    %1047 = vmatprep.subr.bf16.mxu0 %v620
    %1048 = vmatpush1.bf16.msra.mxu0 %v619
    %1049 = vmatprep.subr.bf16.mxu0 %v614
    %1050 = vmatpush1.bf16.msra.mxu0 %v613
    %1051 = vmatprep.subr.bf16.mxu0 %v608
    %1052 = vmatpush1.bf16.msra.mxu0 %v607
    %1053 = vmatprep.subr.bf16.mxu0 %v602
    %1054 = vmatpush1.bf16.msra.mxu0 %v601
    %1055 = vmatprep.subr.bf16.mxu0 %v692
    %1056 = vmatpush2.bf16.msra.mxu0 %v691
    %1057 = vmatprep.subr.bf16.mxu0 %v686
    %1058 = vmatpush2.bf16.msra.mxu0 %v685
    %1059 = vmatprep.subr.bf16.mxu0 %v680
    %1060 = vmatpush2.bf16.msra.mxu0 %v679
    %1061 = vmatprep.subr.bf16.mxu0 %v674
    %1062 = vmatpush2.bf16.msra.mxu0 %v673
    %1063 = vmatprep.subr.bf16.mxu0 %v668
    %1064 = vmatpush2.bf16.msra.mxu0 %v667
    %1065 = vmatprep.subr.bf16.mxu0 %v662
    %1066 = vmatpush2.bf16.msra.mxu0 %v661
    %1067 = vmatprep.subr.bf16.mxu0 %v656
    %1068 = vmatpush2.bf16.msra.mxu0 %v655
    %1069 = vmatprep.subr.bf16.mxu0 %v650
    %1070 = vmatpush2.bf16.msra.mxu0 %v649
    %1071 = vmatprep.mubr.bf16.mxu0 %v997
    %1072 = vmatmul.mubr.bf16.gmra.mxu0 %v996
    %v1073 = vpop.f32.mrf.mxu0
    %v1074 = vadd.f32 0.0, %v1073
    %v1075 = vpop.f32.mrf.mxu0
    %v1076 = vadd.f32 0.0, %v1075
    %v1077 = vpop.f32.mrf.mxu0
    %v1078 = vpop.f32.mrf.mxu0
    %1079 = vdwg.mxu0
    %1080 = vmatprep.subr.bf16.mxu0 %v646
    %1081 = vmatpush1.bf16.msra.mxu0 %v645
    %1082 = vmatprep.subr.bf16.mxu0 %v640
    %1083 = vmatpush1.bf16.msra.mxu0 %v639
    %1084 = vmatprep.subr.bf16.mxu0 %v634
    %1085 = vmatpush1.bf16.msra.mxu0 %v633
    %1086 = vmatprep.subr.bf16.mxu0 %v628
    %1087 = vmatpush1.bf16.msra.mxu0 %v627
    %1088 = vmatprep.subr.bf16.mxu0 %v622
    %1089 = vmatpush1.bf16.msra.mxu0 %v621
    %1090 = vmatprep.subr.bf16.mxu0 %v616
    %1091 = vmatpush1.bf16.msra.mxu0 %v615
    %1092 = vmatprep.subr.bf16.mxu0 %v610
    %1093 = vmatpush1.bf16.msra.mxu0 %v609
    %1094 = vmatprep.subr.bf16.mxu0 %v604
    %1095 = vmatpush1.bf16.msra.mxu0 %v603
    %1096 = vmatprep.subr.bf16.mxu0 %v694
    %1097 = vmatpush2.bf16.msra.mxu0 %v693
    %1098 = vmatprep.subr.bf16.mxu0 %v688
    %1099 = vmatpush2.bf16.msra.mxu0 %v687
    %1100 = vmatprep.subr.bf16.mxu0 %v682
    %1101 = vmatpush2.bf16.msra.mxu0 %v681
    %1102 = vmatprep.subr.bf16.mxu0 %v676
    %1103 = vmatpush2.bf16.msra.mxu0 %v675
    %1104 = vmatprep.subr.bf16.mxu0 %v670
    %1105 = vmatpush2.bf16.msra.mxu0 %v669
    %1106 = vmatprep.subr.bf16.mxu0 %v664
    %1107 = vmatpush2.bf16.msra.mxu0 %v663
    %1108 = vmatprep.subr.bf16.mxu0 %v658
    %1109 = vmatpush2.bf16.msra.mxu0 %v657
    %1110 = vmatprep.subr.bf16.mxu0 %v652
    %1111 = vmatpush2.bf16.msra.mxu0 %v651
    %1112 = vmatprep.mubr.bf16.mxu0 %v997
    %1113 = vmatmul.mubr.bf16.gmra.mxu0 %v996
    %v1114 = vpop.f32.mrf.mxu0
    %v1115 = vadd.f32 0.0, %v1114
    %v1116 = vpop.f32.mrf.mxu0
    %v1117 = vadd.f32 0.0, %v1116
    %v1118 = vpop.f32.mrf.mxu0
    %v1119 = vpop.f32.mrf.mxu0
    %1120 = vdwg.mxu0
    %v1121 = vadd.f32 %v990, %v1033
    %v1122 = vadd.f32 %v991, %v1035
    %v1123 = vmul.f32 %v1121, 0.5
    %v1124 = vmul.f32 %v1122, 0.5
    %v1125 = vtanh.pop %v1123
    %v1126 = vtanh.pop %v1124
    %v1127 = vmul.f32 %v1125, 0.5
    %v1128 = vmul.f32 %v1126, 0.5
    %v1129 = vadd.f32 %v1127, 0.5
    %v1130 = vadd.f32 %v1128, 0.5
    %v1131 = vadd.f32 %v992, %v1074
    %v1132 = vadd.f32 %v993, %v1076
    %v1133 = vmul.f32 %v1131, 0.5
    %v1134 = vmul.f32 %v1132, 0.5
    %v1135 = vtanh.pop %v1133
    %v1136 = vtanh.pop %v1134
    %v1137 = vmul.f32 %v1135, 0.5
    %v1138 = vmul.f32 %v1136, 0.5
    %v1139 = vadd.f32 %v1137, 0.5
    %v1140 = vadd.f32 %v1138, 0.5
    %v1141 = vadd.f32 %v1115, %v938
    %v1142 = vadd.f32 %v1117, %v942
    %v1143 = vmul.f32 %v1129, %v1141
    %v1144 = vmul.f32 %v1130, %v1142
    %v1145 = vadd.f32 %v994, %v1143
    %v1146 = vadd.f32 %v995, %v1144
    %v1147 = vtanh.pop %v1145
    %v1148 = vtanh.pop %v1146
    %v1149 = vsub.f32 1.0, %v1139
    %v1150 = vsub.f32 1.0, %v1140
    %v1151 = vmul.f32 %v1149, %v1147
    %v1152 = vmul.f32 %v1150, %v1148
    %v1153 = vmul.f32 %v1139, %v959
    %v1154 = vmul.f32 %v1140, %v960
    %v1155 = vadd.f32 %v1151, %v1153
    %v1156 = vadd.f32 %v1152, %v1154
    %s1157 = scalar_lea.vmem %s0, 16
    %v1158 = vld [vmem:[%s1157] sm:$0xff]
    %1160 = vset.pattern.permute.xlu0 0
    %1161 = vperm.xlu0 %1160, %v1158
    %v1162 = vpop.permute.xlu0 %1161
    %v1164 = vmul.f32 %v1162, %v177
    %v1165 = vmul.f32 %v1162, %v181
    %v1166 = vmul.f32 %v1162, %v185
    %v1167 = vmul.f32 %v1162, %v189
    %v1168 = vmul.f32 %v1162, %v193
    %v1169 = vmul.f32 %v1162, %v197
    %1170 = vset.pattern.permute.xlu0 1
    %1171 = vperm.xlu0 %1170, %v1158
    %v1172 = vpop.permute.xlu0 %1171
    %v1174 = vmul.f32 %v1172, %v241
    %v1175 = vmul.f32 %v1172, %v245
    %v1176 = vmul.f32 %v1172, %v249
    %v1177 = vmul.f32 %v1172, %v253
    %v1178 = vmul.f32 %v1172, %v257
    %v1179 = vmul.f32 %v1172, %v261
    %v1180 = vadd.f32 %v1164, %v1174
    %v1181 = vadd.f32 %v1165, %v1175
    %v1182 = vadd.f32 %v1166, %v1176
    %v1183 = vadd.f32 %v1167, %v1177
    %v1184 = vadd.f32 %v1168, %v1178
    %v1185 = vadd.f32 %v1169, %v1179
    %v1186 = vadd.f32 %v1180, %v278
    %v1187 = vadd.f32 %v1181, %v282
    %v1188 = vadd.f32 %v1182, %v286
    %v1189 = vadd.f32 %v1183, %v290
    %v1190 = vadd.f32 %v1184, %v294
    %v1191 = vadd.f32 %v1185, %v298
    %v1192 = vpack.c.bf16 %v1155, %v1155
    %v1193 = vpack.c.bf16 %v1156, %v1156
    %1194 = vmatprep.subr.bf16.mxu0 %v642
    %1195 = vmatpush1.bf16.msra.mxu0 %v641
    %1196 = vmatprep.subr.bf16.mxu0 %v636
    %1197 = vmatpush1.bf16.msra.mxu0 %v635
    %1198 = vmatprep.subr.bf16.mxu0 %v630
    %1199 = vmatpush1.bf16.msra.mxu0 %v629
    %1200 = vmatprep.subr.bf16.mxu0 %v624
    %1201 = vmatpush1.bf16.msra.mxu0 %v623
    %1202 = vmatprep.subr.bf16.mxu0 %v618
    %1203 = vmatpush1.bf16.msra.mxu0 %v617
    %1204 = vmatprep.subr.bf16.mxu0 %v612
    %1205 = vmatpush1.bf16.msra.mxu0 %v611
    %1206 = vmatprep.subr.bf16.mxu0 %v606
    %1207 = vmatpush1.bf16.msra.mxu0 %v605
    %1208 = vmatprep.subr.bf16.mxu0 %v600
    %1209 = vmatpush1.bf16.msra.mxu0 %v599
    %1210 = vmatprep.subr.bf16.mxu0 %v690
    %1211 = vmatpush2.bf16.msra.mxu0 %v689
    %1212 = vmatprep.subr.bf16.mxu0 %v684
    %1213 = vmatpush2.bf16.msra.mxu0 %v683
    %1214 = vmatprep.subr.bf16.mxu0 %v678
    %1215 = vmatpush2.bf16.msra.mxu0 %v677
    %1216 = vmatprep.subr.bf16.mxu0 %v672
    %1217 = vmatpush2.bf16.msra.mxu0 %v671
    %1218 = vmatprep.subr.bf16.mxu0 %v666
    %1219 = vmatpush2.bf16.msra.mxu0 %v665
    %1220 = vmatprep.subr.bf16.mxu0 %v660
    %1221 = vmatpush2.bf16.msra.mxu0 %v659
    %1222 = vmatprep.subr.bf16.mxu0 %v654
    %1223 = vmatpush2.bf16.msra.mxu0 %v653
    %1224 = vmatprep.subr.bf16.mxu0 %v648
    %1225 = vmatpush2.bf16.msra.mxu0 %v647
    %1226 = vmatprep.mubr.bf16.mxu0 %v1193
    %1227 = vmatmul.mubr.bf16.gmra.mxu0 %v1192
    %v1228 = vpop.f32.mrf.mxu0
    %v1229 = vadd.f32 0.0, %v1228
    %v1230 = vpop.f32.mrf.mxu0
    %v1231 = vadd.f32 0.0, %v1230
    %v1232 = vpop.f32.mrf.mxu0
    %v1233 = vpop.f32.mrf.mxu0
    %1234 = vdwg.mxu0
    %1235 = vmatprep.subr.bf16.mxu0 %v644
    %1236 = vmatpush1.bf16.msra.mxu0 %v643
    %1237 = vmatprep.subr.bf16.mxu0 %v638
    %1238 = vmatpush1.bf16.msra.mxu0 %v637
    %1239 = vmatprep.subr.bf16.mxu0 %v632
    %1240 = vmatpush1.bf16.msra.mxu0 %v631
    %1241 = vmatprep.subr.bf16.mxu0 %v626
    %1242 = vmatpush1.bf16.msra.mxu0 %v625
    %1243 = vmatprep.subr.bf16.mxu0 %v620
    %1244 = vmatpush1.bf16.msra.mxu0 %v619
    %1245 = vmatprep.subr.bf16.mxu0 %v614
    %1246 = vmatpush1.bf16.msra.mxu0 %v613
    %1247 = vmatprep.subr.bf16.mxu0 %v608
    %1248 = vmatpush1.bf16.msra.mxu0 %v607
    %1249 = vmatprep.subr.bf16.mxu0 %v602
    %1250 = vmatpush1.bf16.msra.mxu0 %v601
    %1251 = vmatprep.subr.bf16.mxu0 %v692
    %1252 = vmatpush2.bf16.msra.mxu0 %v691
    %1253 = vmatprep.subr.bf16.mxu0 %v686
    %1254 = vmatpush2.bf16.msra.mxu0 %v685
    %1255 = vmatprep.subr.bf16.mxu0 %v680
    %1256 = vmatpush2.bf16.msra.mxu0 %v679
    %1257 = vmatprep.subr.bf16.mxu0 %v674
    %1258 = vmatpush2.bf16.msra.mxu0 %v673
    %1259 = vmatprep.subr.bf16.mxu0 %v668
    %1260 = vmatpush2.bf16.msra.mxu0 %v667
    %1261 = vmatprep.subr.bf16.mxu0 %v662
    %1262 = vmatpush2.bf16.msra.mxu0 %v661
    %1263 = vmatprep.subr.bf16.mxu0 %v656
    %1264 = vmatpush2.bf16.msra.mxu0 %v655
    %1265 = vmatprep.subr.bf16.mxu0 %v650
    %1266 = vmatpush2.bf16.msra.mxu0 %v649
    %1267 = vmatprep.mubr.bf16.mxu0 %v1193
    %1268 = vmatmul.mubr.bf16.gmra.mxu0 %v1192
    %v1269 = vpop.f32.mrf.mxu0
    %v1270 = vadd.f32 0.0, %v1269
    %v1271 = vpop.f32.mrf.mxu0
    %v1272 = vadd.f32 0.0, %v1271
    %v1273 = vpop.f32.mrf.mxu0
    %v1274 = vpop.f32.mrf.mxu0
    %1275 = vdwg.mxu0
    %1276 = vmatprep.subr.bf16.mxu0 %v646
    %1277 = vmatpush1.bf16.msra.mxu0 %v645
    %1278 = vmatprep.subr.bf16.mxu0 %v640
    %1279 = vmatpush1.bf16.msra.mxu0 %v639
    %1280 = vmatprep.subr.bf16.mxu0 %v634
    %1281 = vmatpush1.bf16.msra.mxu0 %v633
    %1282 = vmatprep.subr.bf16.mxu0 %v628
    %1283 = vmatpush1.bf16.msra.mxu0 %v627
    %1284 = vmatprep.subr.bf16.mxu0 %v622
    %1285 = vmatpush1.bf16.msra.mxu0 %v621
    %1286 = vmatprep.subr.bf16.mxu0 %v616
    %1287 = vmatpush1.bf16.msra.mxu0 %v615
    %1288 = vmatprep.subr.bf16.mxu0 %v610
    %1289 = vmatpush1.bf16.msra.mxu0 %v609
    %1290 = vmatprep.subr.bf16.mxu0 %v604
    %1291 = vmatpush1.bf16.msra.mxu0 %v603
    %1292 = vmatprep.subr.bf16.mxu0 %v694
    %1293 = vmatpush2.bf16.msra.mxu0 %v693
    %1294 = vmatprep.subr.bf16.mxu0 %v688
    %1295 = vmatpush2.bf16.msra.mxu0 %v687
    %1296 = vmatprep.subr.bf16.mxu0 %v682
    %1297 = vmatpush2.bf16.msra.mxu0 %v681
    %1298 = vmatprep.subr.bf16.mxu0 %v676
    %1299 = vmatpush2.bf16.msra.mxu0 %v675
    %1300 = vmatprep.subr.bf16.mxu0 %v670
    %1301 = vmatpush2.bf16.msra.mxu0 %v669
    %1302 = vmatprep.subr.bf16.mxu0 %v664
    %1303 = vmatpush2.bf16.msra.mxu0 %v663
    %1304 = vmatprep.subr.bf16.mxu0 %v658
    %1305 = vmatpush2.bf16.msra.mxu0 %v657
    %1306 = vmatprep.subr.bf16.mxu0 %v652
    %1307 = vmatpush2.bf16.msra.mxu0 %v651
    %1308 = vmatprep.mubr.bf16.mxu0 %v1193
    %1309 = vmatmul.mubr.bf16.gmra.mxu0 %v1192
    %v1310 = vpop.f32.mrf.mxu0
    %v1311 = vadd.f32 0.0, %v1310
    %v1312 = vpop.f32.mrf.mxu0
    %v1313 = vadd.f32 0.0, %v1312
    %v1314 = vpop.f32.mrf.mxu0
    %v1315 = vpop.f32.mrf.mxu0
    %1316 = vdwg.mxu0
    %v1317 = vadd.f32 %v1186, %v1229
    %v1318 = vadd.f32 %v1187, %v1231
    %v1319 = vmul.f32 %v1317, 0.5
    %v1320 = vmul.f32 %v1318, 0.5
    %v1321 = vtanh.pop %v1319
    %v1322 = vtanh.pop %v1320
    %v1323 = vmul.f32 %v1321, 0.5
    %v1324 = vmul.f32 %v1322, 0.5
    %v1325 = vadd.f32 %v1323, 0.5
    %v1326 = vadd.f32 %v1324, 0.5
    %v1327 = vadd.f32 %v1188, %v1270
    %v1328 = vadd.f32 %v1189, %v1272
    %v1329 = vmul.f32 %v1327, 0.5
    %v1330 = vmul.f32 %v1328, 0.5
    %v1331 = vtanh.pop %v1329
    %v1332 = vtanh.pop %v1330
    %v1333 = vmul.f32 %v1331, 0.5
    %v1334 = vmul.f32 %v1332, 0.5
    %v1335 = vadd.f32 %v1333, 0.5
    %v1336 = vadd.f32 %v1334, 0.5
    %v1337 = vadd.f32 %v1311, %v938
    %v1338 = vadd.f32 %v1313, %v942
    %v1339 = vmul.f32 %v1325, %v1337
    %v1340 = vmul.f32 %v1326, %v1338
    %v1341 = vadd.f32 %v1190, %v1339
    %v1342 = vadd.f32 %v1191, %v1340
    %v1343 = vtanh.pop %v1341
    %v1344 = vtanh.pop %v1342
    %v1345 = vsub.f32 1.0, %v1335
    %v1346 = vsub.f32 1.0, %v1336
    %v1347 = vmul.f32 %v1345, %v1343
    %v1348 = vmul.f32 %v1346, %v1344
    %v1349 = vmul.f32 %v1335, %v1155
    %v1350 = vmul.f32 %v1336, %v1156
    %v1351 = vadd.f32 %v1347, %v1349
    %v1352 = vadd.f32 %v1348, %v1350
    %s1353 = scalar_lea.vmem %s0, 24
    %v1354 = vld [vmem:[%s1353] sm:$0xff]
    %1356 = vset.pattern.permute.xlu0 0
    %1357 = vperm.xlu0 %1356, %v1354
    %v1358 = vpop.permute.xlu0 %1357
    %v1360 = vmul.f32 %v1358, %v177
    %v1361 = vmul.f32 %v1358, %v181
    %v1362 = vmul.f32 %v1358, %v185
    %v1363 = vmul.f32 %v1358, %v189
    %v1364 = vmul.f32 %v1358, %v193
    %v1365 = vmul.f32 %v1358, %v197
    %1366 = vset.pattern.permute.xlu0 1
    %1367 = vperm.xlu0 %1366, %v1354
    %v1368 = vpop.permute.xlu0 %1367
    %v1370 = vmul.f32 %v1368, %v241
    %v1371 = vmul.f32 %v1368, %v245
    %v1372 = vmul.f32 %v1368, %v249
    %v1373 = vmul.f32 %v1368, %v253
    %v1374 = vmul.f32 %v1368, %v257
    %v1375 = vmul.f32 %v1368, %v261
    %v1376 = vadd.f32 %v1360, %v1370
    %v1377 = vadd.f32 %v1361, %v1371
    %v1378 = vadd.f32 %v1362, %v1372
    %v1379 = vadd.f32 %v1363, %v1373
    %v1380 = vadd.f32 %v1364, %v1374
    %v1381 = vadd.f32 %v1365, %v1375
    %v1382 = vadd.f32 %v1376, %v278
    %v1383 = vadd.f32 %v1377, %v282
    %v1384 = vadd.f32 %v1378, %v286
    %v1385 = vadd.f32 %v1379, %v290
    %v1386 = vadd.f32 %v1380, %v294
    %v1387 = vadd.f32 %v1381, %v298
    %v1388 = vpack.c.bf16 %v1351, %v1351
    %v1389 = vpack.c.bf16 %v1352, %v1352
    %1390 = vmatprep.subr.bf16.mxu0 %v642
    %1391 = vmatpush1.bf16.msra.mxu0 %v641
    %1392 = vmatprep.subr.bf16.mxu0 %v636
    %1393 = vmatpush1.bf16.msra.mxu0 %v635
    %1394 = vmatprep.subr.bf16.mxu0 %v630
    %1395 = vmatpush1.bf16.msra.mxu0 %v629
    %1396 = vmatprep.subr.bf16.mxu0 %v624
    %1397 = vmatpush1.bf16.msra.mxu0 %v623
    %1398 = vmatprep.subr.bf16.mxu0 %v618
    %1399 = vmatpush1.bf16.msra.mxu0 %v617
    %1400 = vmatprep.subr.bf16.mxu0 %v612
    %1401 = vmatpush1.bf16.msra.mxu0 %v611
    %1402 = vmatprep.subr.bf16.mxu0 %v606
    %1403 = vmatpush1.bf16.msra.mxu0 %v605
    %1404 = vmatprep.subr.bf16.mxu0 %v600
    %1405 = vmatpush1.bf16.msra.mxu0 %v599
    %1406 = vmatprep.subr.bf16.mxu0 %v690
    %1407 = vmatpush2.bf16.msra.mxu0 %v689
    %1408 = vmatprep.subr.bf16.mxu0 %v684
    %1409 = vmatpush2.bf16.msra.mxu0 %v683
    %1410 = vmatprep.subr.bf16.mxu0 %v678
    %1411 = vmatpush2.bf16.msra.mxu0 %v677
    %1412 = vmatprep.subr.bf16.mxu0 %v672
    %1413 = vmatpush2.bf16.msra.mxu0 %v671
    %1414 = vmatprep.subr.bf16.mxu0 %v666
    %1415 = vmatpush2.bf16.msra.mxu0 %v665
    %1416 = vmatprep.subr.bf16.mxu0 %v660
    %1417 = vmatpush2.bf16.msra.mxu0 %v659
    %1418 = vmatprep.subr.bf16.mxu0 %v654
    %1419 = vmatpush2.bf16.msra.mxu0 %v653
    %1420 = vmatprep.subr.bf16.mxu0 %v648
    %1421 = vmatpush2.bf16.msra.mxu0 %v647
    %1422 = vmatprep.mubr.bf16.mxu0 %v1389
    %1423 = vmatmul.mubr.bf16.gmra.mxu0 %v1388
    %v1424 = vpop.f32.mrf.mxu0
    %v1425 = vadd.f32 0.0, %v1424
    %v1426 = vpop.f32.mrf.mxu0
    %v1427 = vadd.f32 0.0, %v1426
    %v1428 = vpop.f32.mrf.mxu0
    %v1429 = vpop.f32.mrf.mxu0
    %1430 = vdwg.mxu0
    %1431 = vmatprep.subr.bf16.mxu0 %v644
    %1432 = vmatpush1.bf16.msra.mxu0 %v643
    %1433 = vmatprep.subr.bf16.mxu0 %v638
    %1434 = vmatpush1.bf16.msra.mxu0 %v637
    %1435 = vmatprep.subr.bf16.mxu0 %v632
    %1436 = vmatpush1.bf16.msra.mxu0 %v631
    %1437 = vmatprep.subr.bf16.mxu0 %v626
    %1438 = vmatpush1.bf16.msra.mxu0 %v625
    %1439 = vmatprep.subr.bf16.mxu0 %v620
    %1440 = vmatpush1.bf16.msra.mxu0 %v619
    %1441 = vmatprep.subr.bf16.mxu0 %v614
    %1442 = vmatpush1.bf16.msra.mxu0 %v613
    %1443 = vmatprep.subr.bf16.mxu0 %v608
    %1444 = vmatpush1.bf16.msra.mxu0 %v607
    %1445 = vmatprep.subr.bf16.mxu0 %v602
    %1446 = vmatpush1.bf16.msra.mxu0 %v601
    %1447 = vmatprep.subr.bf16.mxu0 %v692
    %1448 = vmatpush2.bf16.msra.mxu0 %v691
    %1449 = vmatprep.subr.bf16.mxu0 %v686
    %1450 = vmatpush2.bf16.msra.mxu0 %v685
    %1451 = vmatprep.subr.bf16.mxu0 %v680
    %1452 = vmatpush2.bf16.msra.mxu0 %v679
    %1453 = vmatprep.subr.bf16.mxu0 %v674
    %1454 = vmatpush2.bf16.msra.mxu0 %v673
    %1455 = vmatprep.subr.bf16.mxu0 %v668
    %1456 = vmatpush2.bf16.msra.mxu0 %v667
    %1457 = vmatprep.subr.bf16.mxu0 %v662
    %1458 = vmatpush2.bf16.msra.mxu0 %v661
    %1459 = vmatprep.subr.bf16.mxu0 %v656
    %1460 = vmatpush2.bf16.msra.mxu0 %v655
    %1461 = vmatprep.subr.bf16.mxu0 %v650
    %1462 = vmatpush2.bf16.msra.mxu0 %v649
    %1463 = vmatprep.mubr.bf16.mxu0 %v1389
    %1464 = vmatmul.mubr.bf16.gmra.mxu0 %v1388
    %v1465 = vpop.f32.mrf.mxu0
    %v1466 = vadd.f32 0.0, %v1465
    %v1467 = vpop.f32.mrf.mxu0
    %v1468 = vadd.f32 0.0, %v1467
    %v1469 = vpop.f32.mrf.mxu0
    %v1470 = vpop.f32.mrf.mxu0
    %1471 = vdwg.mxu0
    %1472 = vmatprep.subr.bf16.mxu0 %v646
    %1473 = vmatpush1.bf16.msra.mxu0 %v645
    %1474 = vmatprep.subr.bf16.mxu0 %v640
    %1475 = vmatpush1.bf16.msra.mxu0 %v639
    %1476 = vmatprep.subr.bf16.mxu0 %v634
    %1477 = vmatpush1.bf16.msra.mxu0 %v633
    %1478 = vmatprep.subr.bf16.mxu0 %v628
    %1479 = vmatpush1.bf16.msra.mxu0 %v627
    %1480 = vmatprep.subr.bf16.mxu0 %v622
    %1481 = vmatpush1.bf16.msra.mxu0 %v621
    %1482 = vmatprep.subr.bf16.mxu0 %v616
    %1483 = vmatpush1.bf16.msra.mxu0 %v615
    %1484 = vmatprep.subr.bf16.mxu0 %v610
    %1485 = vmatpush1.bf16.msra.mxu0 %v609
    %1486 = vmatprep.subr.bf16.mxu0 %v604
    %1487 = vmatpush1.bf16.msra.mxu0 %v603
    %1488 = vmatprep.subr.bf16.mxu0 %v694
    %1489 = vmatpush2.bf16.msra.mxu0 %v693
    %1490 = vmatprep.subr.bf16.mxu0 %v688
    %1491 = vmatpush2.bf16.msra.mxu0 %v687
    %1492 = vmatprep.subr.bf16.mxu0 %v682
    %1493 = vmatpush2.bf16.msra.mxu0 %v681
    %1494 = vmatprep.subr.bf16.mxu0 %v676
    %1495 = vmatpush2.bf16.msra.mxu0 %v675
    %1496 = vmatprep.subr.bf16.mxu0 %v670
    %1497 = vmatpush2.bf16.msra.mxu0 %v669
    %1498 = vmatprep.subr.bf16.mxu0 %v664
    %1499 = vmatpush2.bf16.msra.mxu0 %v663
    %1500 = vmatprep.subr.bf16.mxu0 %v658
    %1501 = vmatpush2.bf16.msra.mxu0 %v657
    %1502 = vmatprep.subr.bf16.mxu0 %v652
    %1503 = vmatpush2.bf16.msra.mxu0 %v651
    %1504 = vmatprep.mubr.bf16.mxu0 %v1389
    %1505 = vmatmul.mubr.bf16.gmra.mxu0 %v1388
    %v1506 = vpop.f32.mrf.mxu0
    %v1507 = vadd.f32 0.0, %v1506
    %v1508 = vpop.f32.mrf.mxu0
    %v1509 = vadd.f32 0.0, %v1508
    %v1510 = vpop.f32.mrf.mxu0
    %v1511 = vpop.f32.mrf.mxu0
    %1512 = vdwg.mxu0
    %v1513 = vadd.f32 %v1382, %v1425
    %v1514 = vadd.f32 %v1383, %v1427
    %v1515 = vmul.f32 %v1513, 0.5
    %v1516 = vmul.f32 %v1514, 0.5
    %v1517 = vtanh.pop %v1515
    %v1518 = vtanh.pop %v1516
    %v1519 = vmul.f32 %v1517, 0.5
    %v1520 = vmul.f32 %v1518, 0.5
    %v1521 = vadd.f32 %v1519, 0.5
    %v1522 = vadd.f32 %v1520, 0.5
    %v1523 = vadd.f32 %v1384, %v1466
    %v1524 = vadd.f32 %v1385, %v1468
    %v1525 = vmul.f32 %v1523, 0.5
    %v1526 = vmul.f32 %v1524, 0.5
    %v1527 = vtanh.pop %v1525
    %v1528 = vtanh.pop %v1526
    %v1529 = vmul.f32 %v1527, 0.5
    %v1530 = vmul.f32 %v1528, 0.5
    %v1531 = vadd.f32 %v1529, 0.5
    %v1532 = vadd.f32 %v1530, 0.5
    %v1533 = vadd.f32 %v1507, %v938
    %v1534 = vadd.f32 %v1509, %v942
    %v1535 = vmul.f32 %v1521, %v1533
    %v1536 = vmul.f32 %v1522, %v1534
    %v1537 = vadd.f32 %v1386, %v1535
    %v1538 = vadd.f32 %v1387, %v1536
    %v1539 = vtanh.pop %v1537
    %v1540 = vtanh.pop %v1538
    %v1541 = vsub.f32 1.0, %v1531
    %v1542 = vsub.f32 1.0, %v1532
    %v1543 = vmul.f32 %v1541, %v1539
    %v1544 = vmul.f32 %v1542, %v1540
    %v1545 = vmul.f32 %v1531, %v1351
    %v1546 = vmul.f32 %v1532, %v1352
    %v1547 = vadd.f32 %v1543, %v1545
    %v1548 = vadd.f32 %v1544, %v1546
    %s1549 = scalar_lea.vmem %s0, 32
    %v1550 = vld [vmem:[%s1549] sm:$0xff]
    %1552 = vset.pattern.permute.xlu0 0
    %1553 = vperm.xlu0 %1552, %v1550
    %v1554 = vpop.permute.xlu0 %1553
    %v1556 = vmul.f32 %v1554, %v177
    %v1557 = vmul.f32 %v1554, %v181
    %v1558 = vmul.f32 %v1554, %v185
    %v1559 = vmul.f32 %v1554, %v189
    %v1560 = vmul.f32 %v1554, %v193
    %v1561 = vmul.f32 %v1554, %v197
    %1562 = vset.pattern.permute.xlu0 1
    %1563 = vperm.xlu0 %1562, %v1550
    %v1564 = vpop.permute.xlu0 %1563
    %v1566 = vmul.f32 %v1564, %v241
    %v1567 = vmul.f32 %v1564, %v245
    %v1568 = vmul.f32 %v1564, %v249
    %v1569 = vmul.f32 %v1564, %v253
    %v1570 = vmul.f32 %v1564, %v257
    %v1571 = vmul.f32 %v1564, %v261
    %v1572 = vadd.f32 %v1556, %v1566
    %v1573 = vadd.f32 %v1557, %v1567
    %v1574 = vadd.f32 %v1558, %v1568
    %v1575 = vadd.f32 %v1559, %v1569
    %v1576 = vadd.f32 %v1560, %v1570
    %v1577 = vadd.f32 %v1561, %v1571
    %v1578 = vadd.f32 %v1572, %v278
    %v1579 = vadd.f32 %v1573, %v282
    %v1580 = vadd.f32 %v1574, %v286
    %v1581 = vadd.f32 %v1575, %v290
    %v1582 = vadd.f32 %v1576, %v294
    %v1583 = vadd.f32 %v1577, %v298
    %v1584 = vpack.c.bf16 %v1547, %v1547
    %v1585 = vpack.c.bf16 %v1548, %v1548
    %1586 = vmatprep.subr.bf16.mxu0 %v642
    %1587 = vmatpush1.bf16.msra.mxu0 %v641
    %1588 = vmatprep.subr.bf16.mxu0 %v636
    %1589 = vmatpush1.bf16.msra.mxu0 %v635
    %1590 = vmatprep.subr.bf16.mxu0 %v630
    %1591 = vmatpush1.bf16.msra.mxu0 %v629
    %1592 = vmatprep.subr.bf16.mxu0 %v624
    %1593 = vmatpush1.bf16.msra.mxu0 %v623
    %1594 = vmatprep.subr.bf16.mxu0 %v618
    %1595 = vmatpush1.bf16.msra.mxu0 %v617
    %1596 = vmatprep.subr.bf16.mxu0 %v612
    %1597 = vmatpush1.bf16.msra.mxu0 %v611
    %1598 = vmatprep.subr.bf16.mxu0 %v606
    %1599 = vmatpush1.bf16.msra.mxu0 %v605
    %1600 = vmatprep.subr.bf16.mxu0 %v600
    %1601 = vmatpush1.bf16.msra.mxu0 %v599
    %1602 = vmatprep.subr.bf16.mxu0 %v690
    %1603 = vmatpush2.bf16.msra.mxu0 %v689
    %1604 = vmatprep.subr.bf16.mxu0 %v684
    %1605 = vmatpush2.bf16.msra.mxu0 %v683
    %1606 = vmatprep.subr.bf16.mxu0 %v678
    %1607 = vmatpush2.bf16.msra.mxu0 %v677
    %1608 = vmatprep.subr.bf16.mxu0 %v672
    %1609 = vmatpush2.bf16.msra.mxu0 %v671
    %1610 = vmatprep.subr.bf16.mxu0 %v666
    %1611 = vmatpush2.bf16.msra.mxu0 %v665
    %1612 = vmatprep.subr.bf16.mxu0 %v660
    %1613 = vmatpush2.bf16.msra.mxu0 %v659
    %1614 = vmatprep.subr.bf16.mxu0 %v654
    %1615 = vmatpush2.bf16.msra.mxu0 %v653
    %1616 = vmatprep.subr.bf16.mxu0 %v648
    %1617 = vmatpush2.bf16.msra.mxu0 %v647
    %1618 = vmatprep.mubr.bf16.mxu0 %v1585
    %1619 = vmatmul.mubr.bf16.gmra.mxu0 %v1584
    %v1620 = vpop.f32.mrf.mxu0
    %v1621 = vadd.f32 0.0, %v1620
    %v1622 = vpop.f32.mrf.mxu0
    %v1623 = vadd.f32 0.0, %v1622
    %v1624 = vpop.f32.mrf.mxu0
    %v1625 = vpop.f32.mrf.mxu0
    %1626 = vdwg.mxu0
    %1627 = vmatprep.subr.bf16.mxu0 %v644
    %1628 = vmatpush1.bf16.msra.mxu0 %v643
    %1629 = vmatprep.subr.bf16.mxu0 %v638
    %1630 = vmatpush1.bf16.msra.mxu0 %v637
    %1631 = vmatprep.subr.bf16.mxu0 %v632
    %1632 = vmatpush1.bf16.msra.mxu0 %v631
    %1633 = vmatprep.subr.bf16.mxu0 %v626
    %1634 = vmatpush1.bf16.msra.mxu0 %v625
    %1635 = vmatprep.subr.bf16.mxu0 %v620
    %1636 = vmatpush1.bf16.msra.mxu0 %v619
    %1637 = vmatprep.subr.bf16.mxu0 %v614
    %1638 = vmatpush1.bf16.msra.mxu0 %v613
    %1639 = vmatprep.subr.bf16.mxu0 %v608
    %1640 = vmatpush1.bf16.msra.mxu0 %v607
    %1641 = vmatprep.subr.bf16.mxu0 %v602
    %1642 = vmatpush1.bf16.msra.mxu0 %v601
    %1643 = vmatprep.subr.bf16.mxu0 %v692
    %1644 = vmatpush2.bf16.msra.mxu0 %v691
    %1645 = vmatprep.subr.bf16.mxu0 %v686
    %1646 = vmatpush2.bf16.msra.mxu0 %v685
    %1647 = vmatprep.subr.bf16.mxu0 %v680
    %1648 = vmatpush2.bf16.msra.mxu0 %v679
    %1649 = vmatprep.subr.bf16.mxu0 %v674
    %1650 = vmatpush2.bf16.msra.mxu0 %v673
    %1651 = vmatprep.subr.bf16.mxu0 %v668
    %1652 = vmatpush2.bf16.msra.mxu0 %v667
    %1653 = vmatprep.subr.bf16.mxu0 %v662
    %1654 = vmatpush2.bf16.msra.mxu0 %v661
    %1655 = vmatprep.subr.bf16.mxu0 %v656
    %1656 = vmatpush2.bf16.msra.mxu0 %v655
    %1657 = vmatprep.subr.bf16.mxu0 %v650
    %1658 = vmatpush2.bf16.msra.mxu0 %v649
    %1659 = vmatprep.mubr.bf16.mxu0 %v1585
    %1660 = vmatmul.mubr.bf16.gmra.mxu0 %v1584
    %v1661 = vpop.f32.mrf.mxu0
    %v1662 = vadd.f32 0.0, %v1661
    %v1663 = vpop.f32.mrf.mxu0
    %v1664 = vadd.f32 0.0, %v1663
    %v1665 = vpop.f32.mrf.mxu0
    %v1666 = vpop.f32.mrf.mxu0
    %1667 = vdwg.mxu0
    %1668 = vmatprep.subr.bf16.mxu0 %v646
    %1669 = vmatpush1.bf16.msra.mxu0 %v645
    %1670 = vmatprep.subr.bf16.mxu0 %v640
    %1671 = vmatpush1.bf16.msra.mxu0 %v639
    %1672 = vmatprep.subr.bf16.mxu0 %v634
    %1673 = vmatpush1.bf16.msra.mxu0 %v633
    %1674 = vmatprep.subr.bf16.mxu0 %v628
    %1675 = vmatpush1.bf16.msra.mxu0 %v627
    %1676 = vmatprep.subr.bf16.mxu0 %v622
    %1677 = vmatpush1.bf16.msra.mxu0 %v621
    %1678 = vmatprep.subr.bf16.mxu0 %v616
    %1679 = vmatpush1.bf16.msra.mxu0 %v615
    %1680 = vmatprep.subr.bf16.mxu0 %v610
    %1681 = vmatpush1.bf16.msra.mxu0 %v609
    %1682 = vmatprep.subr.bf16.mxu0 %v604
    %1683 = vmatpush1.bf16.msra.mxu0 %v603
    %1684 = vmatprep.subr.bf16.mxu0 %v694
    %1685 = vmatpush2.bf16.msra.mxu0 %v693
    %1686 = vmatprep.subr.bf16.mxu0 %v688
    %1687 = vmatpush2.bf16.msra.mxu0 %v687
    %1688 = vmatprep.subr.bf16.mxu0 %v682
    %1689 = vmatpush2.bf16.msra.mxu0 %v681
    %1690 = vmatprep.subr.bf16.mxu0 %v676
    %1691 = vmatpush2.bf16.msra.mxu0 %v675
    %1692 = vmatprep.subr.bf16.mxu0 %v670
    %1693 = vmatpush2.bf16.msra.mxu0 %v669
    %1694 = vmatprep.subr.bf16.mxu0 %v664
    %1695 = vmatpush2.bf16.msra.mxu0 %v663
    %1696 = vmatprep.subr.bf16.mxu0 %v658
    %1697 = vmatpush2.bf16.msra.mxu0 %v657
    %1698 = vmatprep.subr.bf16.mxu0 %v652
    %1699 = vmatpush2.bf16.msra.mxu0 %v651
    %1700 = vmatprep.mubr.bf16.mxu0 %v1585
    %1701 = vmatmul.mubr.bf16.gmra.mxu0 %v1584
    %v1702 = vpop.f32.mrf.mxu0
    %v1703 = vadd.f32 0.0, %v1702
    %v1704 = vpop.f32.mrf.mxu0
    %v1705 = vadd.f32 0.0, %v1704
    %v1706 = vpop.f32.mrf.mxu0
    %v1707 = vpop.f32.mrf.mxu0
    %1708 = vdwg.mxu0
    %v1709 = vadd.f32 %v1578, %v1621
    %v1710 = vadd.f32 %v1579, %v1623
    %v1711 = vmul.f32 %v1709, 0.5
    %v1712 = vmul.f32 %v1710, 0.5
    %v1713 = vtanh.pop %v1711
    %v1714 = vtanh.pop %v1712
    %v1715 = vmul.f32 %v1713, 0.5
    %v1716 = vmul.f32 %v1714, 0.5
    %v1717 = vadd.f32 %v1715, 0.5
    %v1718 = vadd.f32 %v1716, 0.5
    %v1719 = vadd.f32 %v1580, %v1662
    %v1720 = vadd.f32 %v1581, %v1664
    %v1721 = vmul.f32 %v1719, 0.5
    %v1722 = vmul.f32 %v1720, 0.5
    %v1723 = vtanh.pop %v1721
    %v1724 = vtanh.pop %v1722
    %v1725 = vmul.f32 %v1723, 0.5
    %v1726 = vmul.f32 %v1724, 0.5
    %v1727 = vadd.f32 %v1725, 0.5
    %v1728 = vadd.f32 %v1726, 0.5
    %v1729 = vadd.f32 %v1703, %v938
    %v1730 = vadd.f32 %v1705, %v942
    %v1731 = vmul.f32 %v1717, %v1729
    %v1732 = vmul.f32 %v1718, %v1730
    %v1733 = vadd.f32 %v1582, %v1731
    %v1734 = vadd.f32 %v1583, %v1732
    %v1735 = vtanh.pop %v1733
    %v1736 = vtanh.pop %v1734
    %v1737 = vsub.f32 1.0, %v1727
    %v1738 = vsub.f32 1.0, %v1728
    %v1739 = vmul.f32 %v1737, %v1735
    %v1740 = vmul.f32 %v1738, %v1736
    %v1741 = vmul.f32 %v1727, %v1547
    %v1742 = vmul.f32 %v1728, %v1548
    %v1743 = vadd.f32 %v1739, %v1741
    %v1744 = vadd.f32 %v1740, %v1742
    %s1745 = scalar_lea.vmem %s0, 40
    %v1746 = vld [vmem:[%s1745] sm:$0xff]
    %1748 = vset.pattern.permute.xlu0 0
    %1749 = vperm.xlu0 %1748, %v1746
    %v1750 = vpop.permute.xlu0 %1749
    %v1752 = vmul.f32 %v1750, %v177
    %v1753 = vmul.f32 %v1750, %v181
    %v1754 = vmul.f32 %v1750, %v185
    %v1755 = vmul.f32 %v1750, %v189
    %v1756 = vmul.f32 %v1750, %v193
    %v1757 = vmul.f32 %v1750, %v197
    %1758 = vset.pattern.permute.xlu0 1
    %1759 = vperm.xlu0 %1758, %v1746
    %v1760 = vpop.permute.xlu0 %1759
    %v1762 = vmul.f32 %v1760, %v241
    %v1763 = vmul.f32 %v1760, %v245
    %v1764 = vmul.f32 %v1760, %v249
    %v1765 = vmul.f32 %v1760, %v253
    %v1766 = vmul.f32 %v1760, %v257
    %v1767 = vmul.f32 %v1760, %v261
    %v1768 = vadd.f32 %v1752, %v1762
    %v1769 = vadd.f32 %v1753, %v1763
    %v1770 = vadd.f32 %v1754, %v1764
    %v1771 = vadd.f32 %v1755, %v1765
    %v1772 = vadd.f32 %v1756, %v1766
    %v1773 = vadd.f32 %v1757, %v1767
    %v1774 = vadd.f32 %v1768, %v278
    %v1775 = vadd.f32 %v1769, %v282
    %v1776 = vadd.f32 %v1770, %v286
    %v1777 = vadd.f32 %v1771, %v290
    %v1778 = vadd.f32 %v1772, %v294
    %v1779 = vadd.f32 %v1773, %v298
    %v1780 = vpack.c.bf16 %v1743, %v1743
    %v1781 = vpack.c.bf16 %v1744, %v1744
    %1782 = vmatprep.subr.bf16.mxu0 %v642
    %1783 = vmatpush1.bf16.msra.mxu0 %v641
    %1784 = vmatprep.subr.bf16.mxu0 %v636
    %1785 = vmatpush1.bf16.msra.mxu0 %v635
    %1786 = vmatprep.subr.bf16.mxu0 %v630
    %1787 = vmatpush1.bf16.msra.mxu0 %v629
    %1788 = vmatprep.subr.bf16.mxu0 %v624
    %1789 = vmatpush1.bf16.msra.mxu0 %v623
    %1790 = vmatprep.subr.bf16.mxu0 %v618
    %1791 = vmatpush1.bf16.msra.mxu0 %v617
    %1792 = vmatprep.subr.bf16.mxu0 %v612
    %1793 = vmatpush1.bf16.msra.mxu0 %v611
    %1794 = vmatprep.subr.bf16.mxu0 %v606
    %1795 = vmatpush1.bf16.msra.mxu0 %v605
    %1796 = vmatprep.subr.bf16.mxu0 %v600
    %1797 = vmatpush1.bf16.msra.mxu0 %v599
    %1798 = vmatprep.subr.bf16.mxu0 %v690
    %1799 = vmatpush2.bf16.msra.mxu0 %v689
    %1800 = vmatprep.subr.bf16.mxu0 %v684
    %1801 = vmatpush2.bf16.msra.mxu0 %v683
    %1802 = vmatprep.subr.bf16.mxu0 %v678
    %1803 = vmatpush2.bf16.msra.mxu0 %v677
    %1804 = vmatprep.subr.bf16.mxu0 %v672
    %1805 = vmatpush2.bf16.msra.mxu0 %v671
    %1806 = vmatprep.subr.bf16.mxu0 %v666
    %1807 = vmatpush2.bf16.msra.mxu0 %v665
    %1808 = vmatprep.subr.bf16.mxu0 %v660
    %1809 = vmatpush2.bf16.msra.mxu0 %v659
    %1810 = vmatprep.subr.bf16.mxu0 %v654
    %1811 = vmatpush2.bf16.msra.mxu0 %v653
    %1812 = vmatprep.subr.bf16.mxu0 %v648
    %1813 = vmatpush2.bf16.msra.mxu0 %v647
    %1814 = vmatprep.mubr.bf16.mxu0 %v1781
    %1815 = vmatmul.mubr.bf16.gmra.mxu0 %v1780
    %v1816 = vpop.f32.mrf.mxu0
    %v1817 = vadd.f32 0.0, %v1816
    %v1818 = vpop.f32.mrf.mxu0
    %v1819 = vadd.f32 0.0, %v1818
    %v1820 = vpop.f32.mrf.mxu0
    %v1821 = vpop.f32.mrf.mxu0
    %1822 = vdwg.mxu0
    %1823 = vmatprep.subr.bf16.mxu0 %v644
    %1824 = vmatpush1.bf16.msra.mxu0 %v643
    %1825 = vmatprep.subr.bf16.mxu0 %v638
    %1826 = vmatpush1.bf16.msra.mxu0 %v637
    %1827 = vmatprep.subr.bf16.mxu0 %v632
    %1828 = vmatpush1.bf16.msra.mxu0 %v631
    %1829 = vmatprep.subr.bf16.mxu0 %v626
    %1830 = vmatpush1.bf16.msra.mxu0 %v625
    %1831 = vmatprep.subr.bf16.mxu0 %v620
    %1832 = vmatpush1.bf16.msra.mxu0 %v619
    %1833 = vmatprep.subr.bf16.mxu0 %v614
    %1834 = vmatpush1.bf16.msra.mxu0 %v613
    %1835 = vmatprep.subr.bf16.mxu0 %v608
    %1836 = vmatpush1.bf16.msra.mxu0 %v607
    %1837 = vmatprep.subr.bf16.mxu0 %v602
    %1838 = vmatpush1.bf16.msra.mxu0 %v601
    %1839 = vmatprep.subr.bf16.mxu0 %v692
    %1840 = vmatpush2.bf16.msra.mxu0 %v691
    %1841 = vmatprep.subr.bf16.mxu0 %v686
    %1842 = vmatpush2.bf16.msra.mxu0 %v685
    %1843 = vmatprep.subr.bf16.mxu0 %v680
    %1844 = vmatpush2.bf16.msra.mxu0 %v679
    %1845 = vmatprep.subr.bf16.mxu0 %v674
    %1846 = vmatpush2.bf16.msra.mxu0 %v673
    %1847 = vmatprep.subr.bf16.mxu0 %v668
    %1848 = vmatpush2.bf16.msra.mxu0 %v667
    %1849 = vmatprep.subr.bf16.mxu0 %v662
    %1850 = vmatpush2.bf16.msra.mxu0 %v661
    %1851 = vmatprep.subr.bf16.mxu0 %v656
    %1852 = vmatpush2.bf16.msra.mxu0 %v655
    %1853 = vmatprep.subr.bf16.mxu0 %v650
    %1854 = vmatpush2.bf16.msra.mxu0 %v649
    %1855 = vmatprep.mubr.bf16.mxu0 %v1781
    %1856 = vmatmul.mubr.bf16.gmra.mxu0 %v1780
    %v1857 = vpop.f32.mrf.mxu0
    %v1858 = vadd.f32 0.0, %v1857
    %v1859 = vpop.f32.mrf.mxu0
    %v1860 = vadd.f32 0.0, %v1859
    %v1861 = vpop.f32.mrf.mxu0
    %v1862 = vpop.f32.mrf.mxu0
    %1863 = vdwg.mxu0
    %1864 = vmatprep.subr.bf16.mxu0 %v646
    %1865 = vmatpush1.bf16.msra.mxu0 %v645
    %1866 = vmatprep.subr.bf16.mxu0 %v640
    %1867 = vmatpush1.bf16.msra.mxu0 %v639
    %1868 = vmatprep.subr.bf16.mxu0 %v634
    %1869 = vmatpush1.bf16.msra.mxu0 %v633
    %1870 = vmatprep.subr.bf16.mxu0 %v628
    %1871 = vmatpush1.bf16.msra.mxu0 %v627
    %1872 = vmatprep.subr.bf16.mxu0 %v622
    %1873 = vmatpush1.bf16.msra.mxu0 %v621
    %1874 = vmatprep.subr.bf16.mxu0 %v616
    %1875 = vmatpush1.bf16.msra.mxu0 %v615
    %1876 = vmatprep.subr.bf16.mxu0 %v610
    %1877 = vmatpush1.bf16.msra.mxu0 %v609
    %1878 = vmatprep.subr.bf16.mxu0 %v604
    %1879 = vmatpush1.bf16.msra.mxu0 %v603
    %1880 = vmatprep.subr.bf16.mxu0 %v694
    %1881 = vmatpush2.bf16.msra.mxu0 %v693
    %1882 = vmatprep.subr.bf16.mxu0 %v688
    %1883 = vmatpush2.bf16.msra.mxu0 %v687
    %1884 = vmatprep.subr.bf16.mxu0 %v682
    %1885 = vmatpush2.bf16.msra.mxu0 %v681
    %1886 = vmatprep.subr.bf16.mxu0 %v676
    %1887 = vmatpush2.bf16.msra.mxu0 %v675
    %1888 = vmatprep.subr.bf16.mxu0 %v670
    %1889 = vmatpush2.bf16.msra.mxu0 %v669
    %1890 = vmatprep.subr.bf16.mxu0 %v664
    %1891 = vmatpush2.bf16.msra.mxu0 %v663
    %1892 = vmatprep.subr.bf16.mxu0 %v658
    %1893 = vmatpush2.bf16.msra.mxu0 %v657
    %1894 = vmatprep.subr.bf16.mxu0 %v652
    %1895 = vmatpush2.bf16.msra.mxu0 %v651
    %1896 = vmatprep.mubr.bf16.mxu0 %v1781
    %1897 = vmatmul.mubr.bf16.gmra.mxu0 %v1780
    %v1898 = vpop.f32.mrf.mxu0
    %v1899 = vadd.f32 0.0, %v1898
    %v1900 = vpop.f32.mrf.mxu0
    %v1901 = vadd.f32 0.0, %v1900
    %v1902 = vpop.f32.mrf.mxu0
    %v1903 = vpop.f32.mrf.mxu0
    %1904 = vdwg.mxu0
    %v1905 = vadd.f32 %v1774, %v1817
    %v1906 = vadd.f32 %v1775, %v1819
    %v1907 = vmul.f32 %v1905, 0.5
    %v1908 = vmul.f32 %v1906, 0.5
    %v1909 = vtanh.pop %v1907
    %v1910 = vtanh.pop %v1908
    %v1911 = vmul.f32 %v1909, 0.5
    %v1912 = vmul.f32 %v1910, 0.5
    %v1913 = vadd.f32 %v1911, 0.5
    %v1914 = vadd.f32 %v1912, 0.5
    %v1915 = vadd.f32 %v1776, %v1858
    %v1916 = vadd.f32 %v1777, %v1860
    %v1917 = vmul.f32 %v1915, 0.5
    %v1918 = vmul.f32 %v1916, 0.5
    %v1919 = vtanh.pop %v1917
    %v1920 = vtanh.pop %v1918
    %v1921 = vmul.f32 %v1919, 0.5
    %v1922 = vmul.f32 %v1920, 0.5
    %v1923 = vadd.f32 %v1921, 0.5
    %v1924 = vadd.f32 %v1922, 0.5
    %v1925 = vadd.f32 %v1899, %v938
    %v1926 = vadd.f32 %v1901, %v942
    %v1927 = vmul.f32 %v1913, %v1925
    %v1928 = vmul.f32 %v1914, %v1926
    %v1929 = vadd.f32 %v1778, %v1927
    %v1930 = vadd.f32 %v1779, %v1928
    %v1931 = vtanh.pop %v1929
    %v1932 = vtanh.pop %v1930
    %v1933 = vsub.f32 1.0, %v1923
    %v1934 = vsub.f32 1.0, %v1924
    %v1935 = vmul.f32 %v1933, %v1931
    %v1936 = vmul.f32 %v1934, %v1932
    %v1937 = vmul.f32 %v1923, %v1743
    %v1938 = vmul.f32 %v1924, %v1744
    %v1939 = vadd.f32 %v1935, %v1937
    %v1940 = vadd.f32 %v1936, %v1938
    %s1941 = scalar_lea.vmem %s0, 48
    %v1942 = vld [vmem:[%s1941] sm:$0xff]
    %1944 = vset.pattern.permute.xlu0 0
    %1945 = vperm.xlu0 %1944, %v1942
    %v1946 = vpop.permute.xlu0 %1945
    %v1948 = vmul.f32 %v1946, %v177
    %v1949 = vmul.f32 %v1946, %v181
    %v1950 = vmul.f32 %v1946, %v185
    %v1951 = vmul.f32 %v1946, %v189
    %v1952 = vmul.f32 %v1946, %v193
    %v1953 = vmul.f32 %v1946, %v197
    %1954 = vset.pattern.permute.xlu0 1
    %1955 = vperm.xlu0 %1954, %v1942
    %v1956 = vpop.permute.xlu0 %1955
    %v1958 = vmul.f32 %v1956, %v241
    %v1959 = vmul.f32 %v1956, %v245
    %v1960 = vmul.f32 %v1956, %v249
    %v1961 = vmul.f32 %v1956, %v253
    %v1962 = vmul.f32 %v1956, %v257
    %v1963 = vmul.f32 %v1956, %v261
    %v1964 = vadd.f32 %v1948, %v1958
    %v1965 = vadd.f32 %v1949, %v1959
    %v1966 = vadd.f32 %v1950, %v1960
    %v1967 = vadd.f32 %v1951, %v1961
    %v1968 = vadd.f32 %v1952, %v1962
    %v1969 = vadd.f32 %v1953, %v1963
    %v1970 = vadd.f32 %v1964, %v278
    %v1971 = vadd.f32 %v1965, %v282
    %v1972 = vadd.f32 %v1966, %v286
    %v1973 = vadd.f32 %v1967, %v290
    %v1974 = vadd.f32 %v1968, %v294
    %v1975 = vadd.f32 %v1969, %v298
    %v1976 = vpack.c.bf16 %v1939, %v1939
    %v1977 = vpack.c.bf16 %v1940, %v1940
    %1978 = vmatprep.subr.bf16.mxu0 %v642
    %1979 = vmatpush1.bf16.msra.mxu0 %v641
    %1980 = vmatprep.subr.bf16.mxu0 %v636
    %1981 = vmatpush1.bf16.msra.mxu0 %v635
    %1982 = vmatprep.subr.bf16.mxu0 %v630
    %1983 = vmatpush1.bf16.msra.mxu0 %v629
    %1984 = vmatprep.subr.bf16.mxu0 %v624
    %1985 = vmatpush1.bf16.msra.mxu0 %v623
    %1986 = vmatprep.subr.bf16.mxu0 %v618
    %1987 = vmatpush1.bf16.msra.mxu0 %v617
    %1988 = vmatprep.subr.bf16.mxu0 %v612
    %1989 = vmatpush1.bf16.msra.mxu0 %v611
    %1990 = vmatprep.subr.bf16.mxu0 %v606
    %1991 = vmatpush1.bf16.msra.mxu0 %v605
    %1992 = vmatprep.subr.bf16.mxu0 %v600
    %1993 = vmatpush1.bf16.msra.mxu0 %v599
    %1994 = vmatprep.subr.bf16.mxu0 %v690
    %1995 = vmatpush2.bf16.msra.mxu0 %v689
    %1996 = vmatprep.subr.bf16.mxu0 %v684
    %1997 = vmatpush2.bf16.msra.mxu0 %v683
    %1998 = vmatprep.subr.bf16.mxu0 %v678
    %1999 = vmatpush2.bf16.msra.mxu0 %v677
    %2000 = vmatprep.subr.bf16.mxu0 %v672
    %2001 = vmatpush2.bf16.msra.mxu0 %v671
    %2002 = vmatprep.subr.bf16.mxu0 %v666
    %2003 = vmatpush2.bf16.msra.mxu0 %v665
    %2004 = vmatprep.subr.bf16.mxu0 %v660
    %2005 = vmatpush2.bf16.msra.mxu0 %v659
    %2006 = vmatprep.subr.bf16.mxu0 %v654
    %2007 = vmatpush2.bf16.msra.mxu0 %v653
    %2008 = vmatprep.subr.bf16.mxu0 %v648
    %2009 = vmatpush2.bf16.msra.mxu0 %v647
    %2010 = vmatprep.mubr.bf16.mxu0 %v1977
    %2011 = vmatmul.mubr.bf16.gmra.mxu0 %v1976
    %v2012 = vpop.f32.mrf.mxu0
    %v2013 = vadd.f32 0.0, %v2012
    %v2014 = vpop.f32.mrf.mxu0
    %v2015 = vadd.f32 0.0, %v2014
    %v2016 = vpop.f32.mrf.mxu0
    %v2017 = vpop.f32.mrf.mxu0
    %2018 = vdwg.mxu0
    %2019 = vmatprep.subr.bf16.mxu0 %v644
    %2020 = vmatpush1.bf16.msra.mxu0 %v643
    %2021 = vmatprep.subr.bf16.mxu0 %v638
    %2022 = vmatpush1.bf16.msra.mxu0 %v637
    %2023 = vmatprep.subr.bf16.mxu0 %v632
    %2024 = vmatpush1.bf16.msra.mxu0 %v631
    %2025 = vmatprep.subr.bf16.mxu0 %v626
    %2026 = vmatpush1.bf16.msra.mxu0 %v625
    %2027 = vmatprep.subr.bf16.mxu0 %v620
    %2028 = vmatpush1.bf16.msra.mxu0 %v619
    %2029 = vmatprep.subr.bf16.mxu0 %v614
    %2030 = vmatpush1.bf16.msra.mxu0 %v613
    %2031 = vmatprep.subr.bf16.mxu0 %v608
    %2032 = vmatpush1.bf16.msra.mxu0 %v607
    %2033 = vmatprep.subr.bf16.mxu0 %v602
    %2034 = vmatpush1.bf16.msra.mxu0 %v601
    %2035 = vmatprep.subr.bf16.mxu0 %v692
    %2036 = vmatpush2.bf16.msra.mxu0 %v691
    %2037 = vmatprep.subr.bf16.mxu0 %v686
    %2038 = vmatpush2.bf16.msra.mxu0 %v685
    %2039 = vmatprep.subr.bf16.mxu0 %v680
    %2040 = vmatpush2.bf16.msra.mxu0 %v679
    %2041 = vmatprep.subr.bf16.mxu0 %v674
    %2042 = vmatpush2.bf16.msra.mxu0 %v673
    %2043 = vmatprep.subr.bf16.mxu0 %v668
    %2044 = vmatpush2.bf16.msra.mxu0 %v667
    %2045 = vmatprep.subr.bf16.mxu0 %v662
    %2046 = vmatpush2.bf16.msra.mxu0 %v661
    %2047 = vmatprep.subr.bf16.mxu0 %v656
    %2048 = vmatpush2.bf16.msra.mxu0 %v655
    %2049 = vmatprep.subr.bf16.mxu0 %v650
    %2050 = vmatpush2.bf16.msra.mxu0 %v649
    %2051 = vmatprep.mubr.bf16.mxu0 %v1977
    %2052 = vmatmul.mubr.bf16.gmra.mxu0 %v1976
    %v2053 = vpop.f32.mrf.mxu0
    %v2054 = vadd.f32 0.0, %v2053
    %v2055 = vpop.f32.mrf.mxu0
    %v2056 = vadd.f32 0.0, %v2055
    %v2057 = vpop.f32.mrf.mxu0
    %v2058 = vpop.f32.mrf.mxu0
    %2059 = vdwg.mxu0
    %2060 = vmatprep.subr.bf16.mxu0 %v646
    %2061 = vmatpush1.bf16.msra.mxu0 %v645
    %2062 = vmatprep.subr.bf16.mxu0 %v640
    %2063 = vmatpush1.bf16.msra.mxu0 %v639
    %2064 = vmatprep.subr.bf16.mxu0 %v634
    %2065 = vmatpush1.bf16.msra.mxu0 %v633
    %2066 = vmatprep.subr.bf16.mxu0 %v628
    %2067 = vmatpush1.bf16.msra.mxu0 %v627
    %2068 = vmatprep.subr.bf16.mxu0 %v622
    %2069 = vmatpush1.bf16.msra.mxu0 %v621
    %2070 = vmatprep.subr.bf16.mxu0 %v616
    %2071 = vmatpush1.bf16.msra.mxu0 %v615
    %2072 = vmatprep.subr.bf16.mxu0 %v610
    %2073 = vmatpush1.bf16.msra.mxu0 %v609
    %2074 = vmatprep.subr.bf16.mxu0 %v604
    %2075 = vmatpush1.bf16.msra.mxu0 %v603
    %2076 = vmatprep.subr.bf16.mxu0 %v694
    %2077 = vmatpush2.bf16.msra.mxu0 %v693
    %2078 = vmatprep.subr.bf16.mxu0 %v688
    %2079 = vmatpush2.bf16.msra.mxu0 %v687
    %2080 = vmatprep.subr.bf16.mxu0 %v682
    %2081 = vmatpush2.bf16.msra.mxu0 %v681
    %2082 = vmatprep.subr.bf16.mxu0 %v676
    %2083 = vmatpush2.bf16.msra.mxu0 %v675
    %2084 = vmatprep.subr.bf16.mxu0 %v670
    %2085 = vmatpush2.bf16.msra.mxu0 %v669
    %2086 = vmatprep.subr.bf16.mxu0 %v664
    %2087 = vmatpush2.bf16.msra.mxu0 %v663
    %2088 = vmatprep.subr.bf16.mxu0 %v658
    %2089 = vmatpush2.bf16.msra.mxu0 %v657
    %2090 = vmatprep.subr.bf16.mxu0 %v652
    %2091 = vmatpush2.bf16.msra.mxu0 %v651
    %2092 = vmatprep.mubr.bf16.mxu0 %v1977
    %2093 = vmatmul.mubr.bf16.gmra.mxu0 %v1976
    %v2094 = vpop.f32.mrf.mxu0
    %v2095 = vadd.f32 0.0, %v2094
    %v2096 = vpop.f32.mrf.mxu0
    %v2097 = vadd.f32 0.0, %v2096
    %v2098 = vpop.f32.mrf.mxu0
    %v2099 = vpop.f32.mrf.mxu0
    %2100 = vdwg.mxu0
    %v2101 = vadd.f32 %v1970, %v2013
    %v2102 = vadd.f32 %v1971, %v2015
    %v2103 = vmul.f32 %v2101, 0.5
    %v2104 = vmul.f32 %v2102, 0.5
    %v2105 = vtanh.pop %v2103
    %v2106 = vtanh.pop %v2104
    %v2107 = vmul.f32 %v2105, 0.5
    %v2108 = vmul.f32 %v2106, 0.5
    %v2109 = vadd.f32 %v2107, 0.5
    %v2110 = vadd.f32 %v2108, 0.5
    %v2111 = vadd.f32 %v1972, %v2054
    %v2112 = vadd.f32 %v1973, %v2056
    %v2113 = vmul.f32 %v2111, 0.5
    %v2114 = vmul.f32 %v2112, 0.5
    %v2115 = vtanh.pop %v2113
    %v2116 = vtanh.pop %v2114
    %v2117 = vmul.f32 %v2115, 0.5
    %v2118 = vmul.f32 %v2116, 0.5
    %v2119 = vadd.f32 %v2117, 0.5
    %v2120 = vadd.f32 %v2118, 0.5
    %v2121 = vadd.f32 %v2095, %v938
    %v2122 = vadd.f32 %v2097, %v942
    %v2123 = vmul.f32 %v2109, %v2121
    %v2124 = vmul.f32 %v2110, %v2122
    %v2125 = vadd.f32 %v1974, %v2123
    %v2126 = vadd.f32 %v1975, %v2124
    %v2127 = vtanh.pop %v2125
    %v2128 = vtanh.pop %v2126
    %v2129 = vsub.f32 1.0, %v2119
    %v2130 = vsub.f32 1.0, %v2120
    %v2131 = vmul.f32 %v2129, %v2127
    %v2132 = vmul.f32 %v2130, %v2128
    %v2133 = vmul.f32 %v2119, %v1939
    %v2134 = vmul.f32 %v2120, %v1940
    %v2135 = vadd.f32 %v2131, %v2133
    %v2136 = vadd.f32 %v2132, %v2134
    %s2137 = scalar_lea.vmem %s0, 56
    %v2138 = vld [vmem:[%s2137] sm:$0xff]
    %2140 = vset.pattern.permute.xlu0 0
    %2141 = vperm.xlu0 %2140, %v2138
    %v2142 = vpop.permute.xlu0 %2141
    %v2144 = vmul.f32 %v2142, %v177
    %v2145 = vmul.f32 %v2142, %v181
    %v2146 = vmul.f32 %v2142, %v185
    %v2147 = vmul.f32 %v2142, %v189
    %v2148 = vmul.f32 %v2142, %v193
    %v2149 = vmul.f32 %v2142, %v197
    %2150 = vset.pattern.permute.xlu0 1
    %2151 = vperm.xlu0 %2150, %v2138
    %v2152 = vpop.permute.xlu0 %2151
    %v2154 = vmul.f32 %v2152, %v241
    %v2155 = vmul.f32 %v2152, %v245
    %v2156 = vmul.f32 %v2152, %v249
    %v2157 = vmul.f32 %v2152, %v253
    %v2158 = vmul.f32 %v2152, %v257
    %v2159 = vmul.f32 %v2152, %v261
    %v2160 = vadd.f32 %v2144, %v2154
    %v2161 = vadd.f32 %v2145, %v2155
    %v2162 = vadd.f32 %v2146, %v2156
    %v2163 = vadd.f32 %v2147, %v2157
    %v2164 = vadd.f32 %v2148, %v2158
    %v2165 = vadd.f32 %v2149, %v2159
    %v2166 = vadd.f32 %v2160, %v278
    %v2167 = vadd.f32 %v2161, %v282
    %v2168 = vadd.f32 %v2162, %v286
    %v2169 = vadd.f32 %v2163, %v290
    %v2170 = vadd.f32 %v2164, %v294
    %v2171 = vadd.f32 %v2165, %v298
    %v2172 = vpack.c.bf16 %v2135, %v2135
    %v2173 = vpack.c.bf16 %v2136, %v2136
    %2174 = vmatprep.subr.bf16.mxu0 %v642
    %2175 = vmatpush1.bf16.msra.mxu0 %v641
    %2176 = vmatprep.subr.bf16.mxu0 %v636
    %2177 = vmatpush1.bf16.msra.mxu0 %v635
    %2178 = vmatprep.subr.bf16.mxu0 %v630
    %2179 = vmatpush1.bf16.msra.mxu0 %v629
    %2180 = vmatprep.subr.bf16.mxu0 %v624
    %2181 = vmatpush1.bf16.msra.mxu0 %v623
    %2182 = vmatprep.subr.bf16.mxu0 %v618
    %2183 = vmatpush1.bf16.msra.mxu0 %v617
    %2184 = vmatprep.subr.bf16.mxu0 %v612
    %2185 = vmatpush1.bf16.msra.mxu0 %v611
    %2186 = vmatprep.subr.bf16.mxu0 %v606
    %2187 = vmatpush1.bf16.msra.mxu0 %v605
    %2188 = vmatprep.subr.bf16.mxu0 %v600
    %2189 = vmatpush1.bf16.msra.mxu0 %v599
    %2190 = vmatprep.subr.bf16.mxu0 %v690
    %2191 = vmatpush2.bf16.msra.mxu0 %v689
    %2192 = vmatprep.subr.bf16.mxu0 %v684
    %2193 = vmatpush2.bf16.msra.mxu0 %v683
    %2194 = vmatprep.subr.bf16.mxu0 %v678
    %2195 = vmatpush2.bf16.msra.mxu0 %v677
    %2196 = vmatprep.subr.bf16.mxu0 %v672
    %2197 = vmatpush2.bf16.msra.mxu0 %v671
    %2198 = vmatprep.subr.bf16.mxu0 %v666
    %2199 = vmatpush2.bf16.msra.mxu0 %v665
    %2200 = vmatprep.subr.bf16.mxu0 %v660
    %2201 = vmatpush2.bf16.msra.mxu0 %v659
    %2202 = vmatprep.subr.bf16.mxu0 %v654
    %2203 = vmatpush2.bf16.msra.mxu0 %v653
    %2204 = vmatprep.subr.bf16.mxu0 %v648
    %2205 = vmatpush2.bf16.msra.mxu0 %v647
    %2206 = vmatprep.mubr.bf16.mxu0 %v2173
    %2207 = vmatmul.mubr.bf16.gmra.mxu0 %v2172
    %v2208 = vpop.f32.mrf.mxu0
    %v2209 = vadd.f32 0.0, %v2208
    %v2210 = vpop.f32.mrf.mxu0
    %v2211 = vadd.f32 0.0, %v2210
    %v2212 = vpop.f32.mrf.mxu0
    %v2213 = vpop.f32.mrf.mxu0
    %2214 = vdwg.mxu0
    %2215 = vmatprep.subr.bf16.mxu0 %v644
    %2216 = vmatpush1.bf16.msra.mxu0 %v643
    %2217 = vmatprep.subr.bf16.mxu0 %v638
    %2218 = vmatpush1.bf16.msra.mxu0 %v637
    %2219 = vmatprep.subr.bf16.mxu0 %v632
    %2220 = vmatpush1.bf16.msra.mxu0 %v631
    %2221 = vmatprep.subr.bf16.mxu0 %v626
    %2222 = vmatpush1.bf16.msra.mxu0 %v625
    %2223 = vmatprep.subr.bf16.mxu0 %v620
    %2224 = vmatpush1.bf16.msra.mxu0 %v619
    %2225 = vmatprep.subr.bf16.mxu0 %v614
    %2226 = vmatpush1.bf16.msra.mxu0 %v613
    %2227 = vmatprep.subr.bf16.mxu0 %v608
    %2228 = vmatpush1.bf16.msra.mxu0 %v607
    %2229 = vmatprep.subr.bf16.mxu0 %v602
    %2230 = vmatpush1.bf16.msra.mxu0 %v601
    %2231 = vmatprep.subr.bf16.mxu0 %v692
    %2232 = vmatpush2.bf16.msra.mxu0 %v691
    %2233 = vmatprep.subr.bf16.mxu0 %v686
    %2234 = vmatpush2.bf16.msra.mxu0 %v685
    %2235 = vmatprep.subr.bf16.mxu0 %v680
    %2236 = vmatpush2.bf16.msra.mxu0 %v679
    %2237 = vmatprep.subr.bf16.mxu0 %v674
    %2238 = vmatpush2.bf16.msra.mxu0 %v673
    %2239 = vmatprep.subr.bf16.mxu0 %v668
    %2240 = vmatpush2.bf16.msra.mxu0 %v667
    %2241 = vmatprep.subr.bf16.mxu0 %v662
    %2242 = vmatpush2.bf16.msra.mxu0 %v661
    %2243 = vmatprep.subr.bf16.mxu0 %v656
    %2244 = vmatpush2.bf16.msra.mxu0 %v655
    %2245 = vmatprep.subr.bf16.mxu0 %v650
    %2246 = vmatpush2.bf16.msra.mxu0 %v649
    %2247 = vmatprep.mubr.bf16.mxu0 %v2173
    %2248 = vmatmul.mubr.bf16.gmra.mxu0 %v2172
    %v2249 = vpop.f32.mrf.mxu0
    %v2250 = vadd.f32 0.0, %v2249
    %v2251 = vpop.f32.mrf.mxu0
    %v2252 = vadd.f32 0.0, %v2251
    %v2253 = vpop.f32.mrf.mxu0
    %v2254 = vpop.f32.mrf.mxu0
    %2255 = vdwg.mxu0
    %2256 = vmatprep.subr.bf16.mxu0 %v646
    %2257 = vmatpush1.bf16.msra.mxu0 %v645
    %2258 = vmatprep.subr.bf16.mxu0 %v640
    %2259 = vmatpush1.bf16.msra.mxu0 %v639
    %2260 = vmatprep.subr.bf16.mxu0 %v634
    %2261 = vmatpush1.bf16.msra.mxu0 %v633
    %2262 = vmatprep.subr.bf16.mxu0 %v628
    %2263 = vmatpush1.bf16.msra.mxu0 %v627
    %2264 = vmatprep.subr.bf16.mxu0 %v622
    %2265 = vmatpush1.bf16.msra.mxu0 %v621
    %2266 = vmatprep.subr.bf16.mxu0 %v616
    %2267 = vmatpush1.bf16.msra.mxu0 %v615
    %2268 = vmatprep.subr.bf16.mxu0 %v610
    %2269 = vmatpush1.bf16.msra.mxu0 %v609
    %2270 = vmatprep.subr.bf16.mxu0 %v604
    %2271 = vmatpush1.bf16.msra.mxu0 %v603
    %2272 = vmatprep.subr.bf16.mxu0 %v694
    %2273 = vmatpush2.bf16.msra.mxu0 %v693
    %2274 = vmatprep.subr.bf16.mxu0 %v688
    %2275 = vmatpush2.bf16.msra.mxu0 %v687
    %2276 = vmatprep.subr.bf16.mxu0 %v682
    %2277 = vmatpush2.bf16.msra.mxu0 %v681
    %2278 = vmatprep.subr.bf16.mxu0 %v676
    %2279 = vmatpush2.bf16.msra.mxu0 %v675
    %2280 = vmatprep.subr.bf16.mxu0 %v670
    %2281 = vmatpush2.bf16.msra.mxu0 %v669
    %2282 = vmatprep.subr.bf16.mxu0 %v664
    %2283 = vmatpush2.bf16.msra.mxu0 %v663
    %2284 = vmatprep.subr.bf16.mxu0 %v658
    %2285 = vmatpush2.bf16.msra.mxu0 %v657
    %2286 = vmatprep.subr.bf16.mxu0 %v652
    %2287 = vmatpush2.bf16.msra.mxu0 %v651
    %2288 = vmatprep.mubr.bf16.mxu0 %v2173
    %2289 = vmatmul.mubr.bf16.gmra.mxu0 %v2172
    %v2290 = vpop.f32.mrf.mxu0
    %v2291 = vadd.f32 0.0, %v2290
    %v2292 = vpop.f32.mrf.mxu0
    %v2293 = vadd.f32 0.0, %v2292
    %v2294 = vpop.f32.mrf.mxu0
    %v2295 = vpop.f32.mrf.mxu0
    %2296 = vdwg.mxu0
    %v2297 = vadd.f32 %v2166, %v2209
    %v2298 = vadd.f32 %v2167, %v2211
    %v2299 = vmul.f32 %v2297, 0.5
    %v2300 = vmul.f32 %v2298, 0.5
    %v2301 = vtanh.pop %v2299
    %v2302 = vtanh.pop %v2300
    %v2303 = vmul.f32 %v2301, 0.5
    %v2304 = vmul.f32 %v2302, 0.5
    %v2305 = vadd.f32 %v2303, 0.5
    %v2306 = vadd.f32 %v2304, 0.5
    %v2307 = vadd.f32 %v2168, %v2250
    %v2308 = vadd.f32 %v2169, %v2252
    %v2309 = vmul.f32 %v2307, 0.5
    %v2310 = vmul.f32 %v2308, 0.5
    %v2311 = vtanh.pop %v2309
    %v2312 = vtanh.pop %v2310
    %v2313 = vmul.f32 %v2311, 0.5
    %v2314 = vmul.f32 %v2312, 0.5
    %v2315 = vadd.f32 %v2313, 0.5
    %v2316 = vadd.f32 %v2314, 0.5
    %v2317 = vadd.f32 %v2291, %v938
    %v2318 = vadd.f32 %v2293, %v942
    %v2319 = vmul.f32 %v2305, %v2317
    %v2320 = vmul.f32 %v2306, %v2318
    %v2321 = vadd.f32 %v2170, %v2319
    %v2322 = vadd.f32 %v2171, %v2320
    %v2323 = vtanh.pop %v2321
    %v2324 = vtanh.pop %v2322
    %v2325 = vsub.f32 1.0, %v2315
    %v2326 = vsub.f32 1.0, %v2316
    %v2327 = vmul.f32 %v2325, %v2323
    %v2328 = vmul.f32 %v2326, %v2324
    %v2329 = vmul.f32 %v2315, %v2135
    %v2330 = vmul.f32 %v2316, %v2136
    %v2331 = vadd.f32 %v2327, %v2329
    %v2332 = vadd.f32 %v2328, %v2330
    %2333 = vst [vmem:[#allocation5] sm:$0xff] %v2331
    %2334 = vst [vmem:[#allocation5 + $0x8] sm:$0xff] %v2332
    // Predicated region
    $region26: #{motion_encoder_pallas.1} parent=1 // pred_check
      _
    $region27: #{motion_encoder_pallas.1} parent=1 // pred_check_branch
      %2336 = sbr.rel (0) target = $region29
    $region28: #{motion_encoder_pallas.1} parent=1 // pred_region
      %s2338 = ssub.s32 256, 256
      %2339 = vsyncadd [#allocation4], %s2338
      %s2341 = sshll.u32 [#allocation5], 4
      %s2342 = int_to_ptr.vmem [resolvable:$true] %s2341
      %2344 = dma.vmem_to_hbm [thread:$0]  %s2342, 256, %s5, [#allocation4]
    $region29: #{motion_encoder_pallas.1} parent=1 // pred_fallthru
      _
    // Predicated region
    $region30: #{motion_encoder_pallas.1} parent=1 // pred_check
      _
    $region31: #{motion_encoder_pallas.1} parent=1 // pred_check_branch
      %2346 = sbr.rel (0) target = $region33
    $region32: #{motion_encoder_pallas.1} parent=1 // pred_region
      %2347 = dma.done [#allocation4], 256
    $region33: #{motion_encoder_pallas.1} parent=1 // pred_fallthru
      _
    %2348 = vsyncpa [#allocation3], 1
    %2349 = vsyncpa [#allocation4], 1

</llo_original>
